<compile_context>
chip_gen: v7x
topology: tpu7x:2x2x1
jax: 0.10.0
libtpu: 0.0.40
codegen_flags: <defaults>
</compile_context>

<pallas_src>
import functools

import jax
import jax.numpy as jnp
from jax import lax
from jax.experimental import pallas as pl
from jax.experimental.pallas import tpu as pltpu


# ---------------------------------------------------------------------------
# Fused Pallas kernel (wavefront LSTM layers + final Linear)
# ---------------------------------------------------------------------------

def _make_fused_kernel(T, B, H, L, O_pad):
    """Kernel over refs:
       x(T*B, D), Wx(D, 4LH), bias(1, 4LH), Wr(LH, 4LH),
       fcwT(T*H, O_pad), fcb(1, O_pad), out(B, O_pad).
       Fused gate column layout: gate q in {i,f,g,o}, layer l -> cols (q*L+l)*H."""
    HL = L * H          # concatenated hidden width  [h_0 | h_1 | ... | h_{L-1}]
    GL = 4 * HL         # fused gate width

    def kernel(x_ref, wx_ref, bias_ref, wr_ref, fcw_ref, fcb_ref, out_ref):
        f32 = jnp.float32

        # ---- hoisted constants / weights ---------------------------------
        lane_g = lax.broadcasted_iota(jnp.int32, (B, GL), 1)
        is_g = (lane_g >= 2 * HL) & (lane_g < 3 * HL)          # tanh ("g") lanes
        # sigmoid(x) = 0.5 * tanh(0.5 * x) + 0.5  ->  one tanh pass per step.
        pre = jnp.where(is_g, 1.0, 0.5).astype(f32)            # pre/post scale
        off = jnp.where(is_g, 0.0, 0.5).astype(f32)            # post offset

        lane_h = lax.broadcasted_iota(jnp.int32, (B, HL), 1)
        # start_masks[s]: 1.0 on lanes of layers that have started by step s.
        start_masks = [(lane_h < (s + 1) * H).astype(f32) for s in range(L - 1)]

        wr = wr_ref[...]                                       # (LH, 4LH) hoisted

        # Layer-0 input projection + every layer's bias, whole sequence, one matmul.
        addin = jnp.dot(x_ref[...], wx_ref[...],
                        preferred_element_type=f32) + bias_ref[...]   # (T*B, GL)

        h_cat = jnp.zeros((B, HL), f32)
        c_cat = jnp.zeros((B, HL), f32)
        h_last = []                                            # last layer's h_t

        # ---- wavefront recurrence: layer l runs its time step (s - l) -----
        for s in range(T + L - 1):
            if s == 0:
                # h_cat == 0: skip the recurrent matmul entirely.
                gates = addin[0:B, :]
            else:
                rec = jnp.dot(h_cat, wr, preferred_element_type=f32)   # (B, GL)
                if s < T:
                    gates = addin[s * B:(s + 1) * B, :] + rec
                else:
                    # Layer 0 is past its end: its lanes are harmless garbage.
                    gates = bias_ref[...] + rec

            act = pre * jnp.tanh(pre * gates) + off            # one EUP pass
            i_cat = act[:, 0 * HL:1 * HL]
            f_cat = act[:, 1 * HL:2 * HL]
            g_cat = act[:, 2 * HL:3 * HL]
            o_cat = act[:, 3 * HL:4 * HL]
            c_cat = f_cat * c_cat + i_cat * g_cat
            h_cat = o_cat * jnp.tanh(c_cat)

            if s < L - 1:                                      # not-yet-started layers stay 0
                c_cat = c_cat * start_masks[s]
                h_cat = h_cat * start_masks[s]
            if s >= L - 1:
                h_last.append(h_cat[:, (L - 1) * H:L * H])     # h_{L-1} at time s-(L-1)

        # ---- final Linear, matching torch's x.reshape(-1, T*H) -------------
        # xflat[r, p*H:(p+1)*H] = h_last[(r*T+p)//B][(r*T+p)%B]
        # out[r] = sum_p xflat[r, p*H:(p+1)*H] @ W[p*H:(p+1)*H] + b
        acc = jnp.zeros((B, O_pad), f32)
        for p in range(T):
            rows = []
            for r in range(B):
                k = r * T + p
                rows.append(h_last[k // B][k % B:k % B + 1, :])
            slab = rows[0] if B == 1 else jnp.concatenate(rows, axis=0)   # (B, H)
            acc = acc + jnp.dot(slab, fcw_ref[p * H:(p + 1) * H, :],
                                preferred_element_type=f32)
        out_ref[...] = (acc + fcb_ref[...]).astype(out_ref.dtype)

    return kernel


# ---------------------------------------------------------------------------
# Wrapper
# ---------------------------------------------------------------------------

_VMEM = pl.BlockSpec(memory_space=pltpu.MemorySpace.VMEM)


@functools.partial(jax.jit, static_argnames=("num_frames", "input_size",
                                              "hidden_size", "output_size"))
def lstm_model_forward(inp, params, *, num_frames, input_size, hidden_size,
                       output_size):
    """Reproduces LSTM.forward (eval semantics) with one fused Pallas kernel."""
    T, D, H, O = num_frames, input_size, hidden_size, output_size
    x = inp.reshape(T, -1, D)                       # (T, B, D), as in torch
    B = x.shape[1]
    TB = T * B
    L = len(params["lstm"])
    HL = L * H
    GL = 4 * HL
    O_pad = max(128, ((O + 127) // 128) * 128)      # lane-dense kernel output

    # ---- build fused / interleaved weights (gate q, layer l -> cols (q*L+l)*H)
    Wx = jnp.zeros((D, GL), jnp.float32)            # layer-0 input projection
    bias_cat = jnp.zeros((GL,), jnp.float32)        # all layers' (b_ih + b_hh)
    Wr = jnp.zeros((HL, GL), jnp.float32)           # block-structured recurrent/input
    for l, (w_ih, w_hh, b_ih, b_hh) in enumerate(params["lstm"]):
        w_ihT = w_ih.T.astype(jnp.float32)          # (D_in, 4H)
        w_hhT = w_hh.T.astype(jnp.float32)          # (H, 4H)
        b = (b_ih + b_hh).astype(jnp.float32)       # (4H,)
        for q in range(4):
            c0 = (q * L + l) * H
            bias_cat = bias_cat.at[c0:c0 + H].set(b[q * H:(q + 1) * H])
            Wr = Wr.at[l * H:(l + 1) * H, c0:c0 + H].set(w_hhT[:, q * H:(q + 1) * H])
            if l == 0:
                Wx = Wx.at[:, c0:c0 + H].set(w_ihT[:, q * H:(q + 1) * H])
            else:
                Wr = Wr.at[(l - 1) * H:l * H, c0:c0 + H].set(
                    w_ihT[:, q * H:(q + 1) * H])
    bias_cat = bias_cat.reshape(1, GL)

    fc_wT = jnp.pad(params["fc_w"].T.astype(jnp.float32),
                    ((0, 0), (0, O_pad - O)))                    # (T*H, O_pad)
    fc_b = jnp.pad(params["fc_b"].astype(jnp.float32),
                   (0, O_pad - O)).reshape(1, O_pad)

    args = [x.reshape(TB, D).astype(jnp.float32), Wx, bias_cat, Wr, fc_wT, fc_b]

    # Advisory cost estimate for XLA scheduling.
    flops = (2 * TB * D * GL                        # hoisted input projection
             + (T + L - 2) * 2 * B * HL * GL        # fused wavefront matmuls
             + T * 2 * B * H * O_pad)               # final linear
    trans = (T + L - 1) * B * (GL + HL)             # tanh(gates) + tanh(c) per step
    bytes_accessed = sum(int(a.size) * 4 for a in args) + B * O_pad * 4

    kernel = _make_fused_kernel(T, B, H, L, O_pad)

    # TODO(synk): for large B/H/T, add a batch grid axis with BlockSpec pipelining,
    # dimension_semantics=("parallel",) (2 TensorCores on v7x), size blocks for
    # v7x's 64 MiB VMEM, and switch the fully-unrolled loop / held h_t list to a
    # chunked lax.fori_loop(unroll=True) with lane-dense scratch writes before
    # vreg pressure becomes the bottleneck.  At these shapes (~0.3 MiB total)
    # everything is trivially VMEM-resident and latency-bound.
    out = pl.pallas_call(
        kernel,
        out_shape=jax.ShapeDtypeStruct((B, O_pad), jnp.float32),
        in_specs=[_VMEM] * len(args),
        out_specs=_VMEM,
        cost_estimate=pl.CostEstimate(flops=int(flops),
                                      transcendentals=int(trans),
                                      bytes_accessed=int(bytes_accessed)),
    )(*args)
    return out[:, :O]


# ---------------------------------------------------------------------------
# Parameter init (PyTorch-style uniform) and pure-JAX reference
# ---------------------------------------------------------------------------

def init_params(key, input_size, hidden_size, num_layers, output_size, num_frames):
    params = {"lstm": []}
    k = 1.0 / jnp.sqrt(hidden_size)
    keys = jax.random.split(key, num_layers * 4 + 2)
    ki = 0
    for layer in range(num_layers):
        d_in = input_size if layer == 0 else hidden_size
        w_ih = jax.random.uniform(keys[ki], (4 * hidden_size, d_in), minval=-k, maxval=k); ki += 1
        w_hh = jax.random.uniform(keys[ki], (4 * hidden_size, hidden_size), minval=-k, maxval=k); ki += 1
        b_ih = jax.random.uniform(keys[ki], (4 * hidden_size,), minval=-k, maxval=k); ki += 1
        b_hh = jax.random.uniform(keys[ki], (4 * hidden_size,), minval=-k, maxval=k); ki += 1
        params["lstm"].append((w_ih, w_hh, b_ih, b_hh))
    hidden_output_size = hidden_size * num_frames
    kf = 1.0 / jnp.sqrt(hidden_output_size)
    params["fc_w"] = jax.random.uniform(keys[ki], (output_size, hidden_output_size),
                                        minval=-kf, maxval=kf); ki += 1
    params["fc_b"] = jax.random.uniform(keys[ki], (output_size,), minval=-kf, maxval=kf)
    return params


def _ref_forward(inp, params, num_frames, input_size, hidden_size):
    x = inp.reshape(num_frames, -1, input_size)
    H = hidden_size
    for (w_ih, w_hh, b_ih, b_hh) in params["lstm"]:
        T, B, _ = x.shape
        h = jnp.zeros((B, H), jnp.float32)
        c = jnp.zeros((B, H), jnp.float32)
        outs = []
        for t in range(T):
            gates = x[t] @ w_ih.T + h @ w_hh.T + b_ih + b_hh
            i_g = jax.nn.sigmoid(gates[:, 0 * H:1 * H])
            f_g = jax.nn.sigmoid(gates[:, 1 * H:2 * H])
            g_g = jnp.tanh(gates[:, 2 * H:3 * H])
            o_g = jax.nn.sigmoid(gates[:, 3 * H:4 * H])
            c = f_g * c + i_g * g_g
            h = o_g * jnp.tanh(c)
            outs.append(h)
        x = jnp.stack(outs, axis=0)
    x_flat = x.reshape(-1, hidden_size * num_frames)
    return x_flat @ params["fc_w"].T + params["fc_b"]


# ---------------------------------------------------------------------------
# Main
# ---------------------------------------------------------------------------

if __name__ == "__main__":
    input_size = 32          # feature_extractor_parameters["representation_size"]
    hidden_size = 32         # transformer_parameters["feedforward_size"]
    num_layers = 2           # transformer_parameters["num_encoder_layers"]
    output_size = 16         # transformer_parameters["output_size"]
    num_frames = 8           # train_parameters["num_segments"]
    batch = 2

    key = jax.random.PRNGKey(0)
    k_in, k_par = jax.random.split(key)

    # Input: (T*B, D); forward reshapes it to (T, B, D), same as torch.
    inp = jax.random.normal(k_in, (num_frames * batch, input_size), dtype=jnp.float32)
    params = init_params(k_par, input_size, hidden_size, num_layers,
                         output_size, num_frames)

    out = lstm_model_forward(inp, params, num_frames=num_frames,
                             input_size=input_size, hidden_size=hidden_size,
                             output_size=output_size)
    out = jax.block_until_ready(out)

    ref = _ref_forward(inp, params, num_frames, input_size, hidden_size)
    assert out.shape == (batch, output_size), out.shape
    max_err = float(jnp.max(jnp.abs(out - ref)))
    assert max_err < 1e-4, f"max err {max_err}"

    print("KERNEL_OK")
</pallas_src>

<mosaic_0001>
module attributes {stable_mosaic.version = 11 : i64} {
  func.func @kernel(%arg0: memref<16x32xf32, #tpu.memory_space<vmem>>, %arg1: memref<32x256xf32, #tpu.memory_space<vmem>>, %arg2: memref<1x256xf32, #tpu.memory_space<vmem>>, %arg3: memref<64x256xf32, #tpu.memory_space<vmem>>, %arg4: memref<256x128xf32, #tpu.memory_space<vmem>>, %arg5: memref<1x128xf32, #tpu.memory_space<vmem>>, %arg6: memref<2x128xf32, #tpu.memory_space<vmem>>) attributes {dimension_semantics = [], scalar_prefetch = 0 : i64, scratch_operands = 0 : i64, tpu.core_type = #tpu.core_type<tc>} {
    %0 = tpu.iota {dimensions = array<i32: 1>} : vector<2x256xi32>
    %c128_i32 = arith.constant 128 : i32
    %1 = vector.broadcast %c128_i32 : i32 to vector<2x256xi32>
    %2 = arith.cmpi sge, %0, %1 : vector<2x256xi32>
    %c192_i32 = arith.constant 192 : i32
    %3 = vector.broadcast %c192_i32 : i32 to vector<2x256xi32>
    %4 = arith.cmpi slt, %0, %3 : vector<2x256xi32>
    %5 = arith.andi %2, %4 : vector<2x256xi1>
    %cst = arith.constant 1.000000e+00 : f32
    %cst_0 = arith.constant 5.000000e-01 : f32
    %6 = vector.broadcast %cst : f32 to vector<2x256xf32>
    %7 = vector.broadcast %cst_0 : f32 to vector<2x256xf32>
    %8 = arith.select %5, %6, %7 : vector<2x256xi1>, vector<2x256xf32>
    %cst_1 = arith.constant 0.000000e+00 : f32
    %cst_2 = arith.constant 5.000000e-01 : f32
    %9 = vector.broadcast %cst_1 : f32 to vector<2x256xf32>
    %10 = vector.broadcast %cst_2 : f32 to vector<2x256xf32>
    %11 = arith.select %5, %9, %10 : vector<2x256xi1>, vector<2x256xf32>
    %12 = tpu.iota {dimensions = array<i32: 1>} : vector<2x64xi32>
    %c32_i32 = arith.constant 32 : i32
    %13 = vector.broadcast %c32_i32 : i32 to vector<2x64xi32>
    %14 = arith.cmpi slt, %12, %13 : vector<2x64xi32>
    %15 = arith.extui %14 : vector<2x64xi1> to vector<2x64xi32>
    %16 = arith.sitofp %15 : vector<2x64xi32> to vector<2x64xf32>
    %c0 = arith.constant 0 : index
    %c0_3 = arith.constant 0 : index
    %17 = vector.load %arg3[%c0, %c0_3] : memref<64x256xf32, #tpu.memory_space<vmem>>, vector<64x256xf32>
    %c0_4 = arith.constant 0 : index
    %c0_5 = arith.constant 0 : index
    %18 = vector.load %arg0[%c0_4, %c0_5] : memref<16x32xf32, #tpu.memory_space<vmem>>, vector<16x32xf32>
    %c0_6 = arith.constant 0 : index
    %c0_7 = arith.constant 0 : index
    %19 = vector.load %arg1[%c0_6, %c0_7] : memref<32x256xf32, #tpu.memory_space<vmem>>, vector<32x256xf32>
    %cst_8 = arith.constant dense<0.000000e+00> : vector<16x256xf32>
    %20 = tpu.matmul %18, %19, %cst_8 {dimension_numbers = #tpu.dot_dimension_numbers<[1], [0], [0], [1], [0, 0, 1, 1], [], []>} : vector<16x32xf32>, vector<32x256xf32>, vector<16x256xf32> -> vector<16x256xf32>
    %c0_9 = arith.constant 0 : index
    %c0_10 = arith.constant 0 : index
    %21 = vector.load %arg2[%c0_9, %c0_10] : memref<1x256xf32, #tpu.memory_space<vmem>>, vector<1x256xf32>
    %22 = vector.broadcast %21 : vector<1x256xf32> to vector<16x256xf32>
    %23 = arith.addf %20, %22 : vector<16x256xf32>
    %cst_11 = arith.constant 0.000000e+00 : f32
    %24 = vector.broadcast %cst_11 : f32 to vector<2x64xf32>
    %25 = vector.extract_strided_slice %23 {offsets = [0, 0], sizes = [2, 256], strides = [1, 1]} : vector<16x256xf32> to vector<2x256xf32>
    %26 = arith.mulf %8, %25 : vector<2x256xf32>
    %27 = math.tanh %26 : vector<2x256xf32>
    %28 = arith.mulf %8, %27 : vector<2x256xf32>
    %29 = arith.addf %28, %11 : vector<2x256xf32>
    %30 = vector.extract_strided_slice %29 {offsets = [0, 0], sizes = [2, 64], strides = [1, 1]} : vector<2x256xf32> to vector<2x64xf32>
    %31 = vector.extract_strided_slice %29 {offsets = [0, 64], sizes = [2, 64], strides = [1, 1]} : vector<2x256xf32> to vector<2x64xf32>
    %32 = vector.extract_strided_slice %29 {offsets = [0, 128], sizes = [2, 64], strides = [1, 1]} : vector<2x256xf32> to vector<2x64xf32>
    %33 = vector.extract_strided_slice %29 {offsets = [0, 192], sizes = [2, 64], strides = [1, 1]} : vector<2x256xf32> to vector<2x64xf32>
    %34 = arith.mulf %31, %24 : vector<2x64xf32>
    %35 = arith.mulf %30, %32 : vector<2x64xf32>
    %36 = arith.addf %34, %35 : vector<2x64xf32>
    %37 = math.tanh %36 : vector<2x64xf32>
    %38 = arith.mulf %33, %37 : vector<2x64xf32>
    %39 = arith.mulf %36, %16 : vector<2x64xf32>
    %40 = arith.mulf %38, %16 : vector<2x64xf32>
    %cst_12 = arith.constant dense<0.000000e+00> : vector<2x256xf32>
    %41 = tpu.matmul %40, %17, %cst_12 {dimension_numbers = #tpu.dot_dimension_numbers<[1], [0], [0], [1], [0, 0, 1, 1], [], []>} : vector<2x64xf32>, vector<64x256xf32>, vector<2x256xf32> -> vector<2x256xf32>
    %42 = vector.extract_strided_slice %23 {offsets = [2, 0], sizes = [2, 256], strides = [1, 1]} : vector<16x256xf32> to vector<2x256xf32>
    %43 = arith.addf %42, %41 : vector<2x256xf32>
    %44 = arith.mulf %8, %43 : vector<2x256xf32>
    %45 = math.tanh %44 : vector<2x256xf32>
    %46 = arith.mulf %8, %45 : vector<2x256xf32>
    %47 = arith.addf %46, %11 : vector<2x256xf32>
    %48 = vector.extract_strided_slice %47 {offsets = [0, 0], sizes = [2, 64], strides = [1, 1]} : vector<2x256xf32> to vector<2x64xf32>
    %49 = vector.extract_strided_slice %47 {offsets = [0, 64], sizes = [2, 64], strides = [1, 1]} : vector<2x256xf32> to vector<2x64xf32>
    %50 = vector.extract_strided_slice %47 {offsets = [0, 128], sizes = [2, 64], strides = [1, 1]} : vector<2x256xf32> to vector<2x64xf32>
    %51 = vector.extract_strided_slice %47 {offsets = [0, 192], sizes = [2, 64], strides = [1, 1]} : vector<2x256xf32> to vector<2x64xf32>
    %52 = arith.mulf %49, %39 : vector<2x64xf32>
    %53 = arith.mulf %48, %50 : vector<2x64xf32>
    %54 = arith.addf %52, %53 : vector<2x64xf32>
    %55 = math.tanh %54 : vector<2x64xf32>
    %56 = arith.mulf %51, %55 : vector<2x64xf32>
    %57 = vector.extract_strided_slice %56 {offsets = [0, 32], sizes = [2, 32], strides = [1, 1]} : vector<2x64xf32> to vector<2x32xf32>
    %cst_13 = arith.constant dense<0.000000e+00> : vector<2x256xf32>
    %58 = tpu.matmul %56, %17, %cst_13 {dimension_numbers = #tpu.dot_dimension_numbers<[1], [0], [0], [1], [0, 0, 1, 1], [], []>} : vector<2x64xf32>, vector<64x256xf32>, vector<2x256xf32> -> vector<2x256xf32>
    %59 = vector.extract_strided_slice %23 {offsets = [4, 0], sizes = [2, 256], strides = [1, 1]} : vector<16x256xf32> to vector<2x256xf32>
    %60 = arith.addf %59, %58 : vector<2x256xf32>
    %61 = arith.mulf %8, %60 : vector<2x256xf32>
    %62 = math.tanh %61 : vector<2x256xf32>
    %63 = arith.mulf %8, %62 : vector<2x256xf32>
    %64 = arith.addf %63, %11 : vector<2x256xf32>
    %65 = vector.extract_strided_slice %64 {offsets = [0, 0], sizes = [2, 64], strides = [1, 1]} : vector<2x256xf32> to vector<2x64xf32>
    %66 = vector.extract_strided_slice %64 {offsets = [0, 64], sizes = [2, 64], strides = [1, 1]} : vector<2x256xf32> to vector<2x64xf32>
    %67 = vector.extract_strided_slice %64 {offsets = [0, 128], sizes = [2, 64], strides = [1, 1]} : vector<2x256xf32> to vector<2x64xf32>
    %68 = vector.extract_strided_slice %64 {offsets = [0, 192], sizes = [2, 64], strides = [1, 1]} : vector<2x256xf32> to vector<2x64xf32>
    %69 = arith.mulf %66, %54 : vector<2x64xf32>
    %70 = arith.mulf %65, %67 : vector<2x64xf32>
    %71 = arith.addf %69, %70 : vector<2x64xf32>
    %72 = math.tanh %71 : vector<2x64xf32>
    %73 = arith.mulf %68, %72 : vector<2x64xf32>
    %74 = vector.extract_strided_slice %73 {offsets = [0, 32], sizes = [2, 32], strides = [1, 1]} : vector<2x64xf32> to vector<2x32xf32>
    %cst_14 = arith.constant dense<0.000000e+00> : vector<2x256xf32>
    %75 = tpu.matmul %73, %17, %cst_14 {dimension_numbers = #tpu.dot_dimension_numbers<[1], [0], [0], [1], [0, 0, 1, 1], [], []>} : vector<2x64xf32>, vector<64x256xf32>, vector<2x256xf32> -> vector<2x256xf32>
    %76 = vector.extract_strided_slice %23 {offsets = [6, 0], sizes = [2, 256], strides = [1, 1]} : vector<16x256xf32> to vector<2x256xf32>
    %77 = arith.addf %76, %75 : vector<2x256xf32>
    %78 = arith.mulf %8, %77 : vector<2x256xf32>
    %79 = math.tanh %78 : vector<2x256xf32>
    %80 = arith.mulf %8, %79 : vector<2x256xf32>
    %81 = arith.addf %80, %11 : vector<2x256xf32>
    %82 = vector.extract_strided_slice %81 {offsets = [0, 0], sizes = [2, 64], strides = [1, 1]} : vector<2x256xf32> to vector<2x64xf32>
    %83 = vector.extract_strided_slice %81 {offsets = [0, 64], sizes = [2, 64], strides = [1, 1]} : vector<2x256xf32> to vector<2x64xf32>
    %84 = vector.extract_strided_slice %81 {offsets = [0, 128], sizes = [2, 64], strides = [1, 1]} : vector<2x256xf32> to vector<2x64xf32>
    %85 = vector.extract_strided_slice %81 {offsets = [0, 192], sizes = [2, 64], strides = [1, 1]} : vector<2x256xf32> to vector<2x64xf32>
    %86 = arith.mulf %83, %71 : vector<2x64xf32>
    %87 = arith.mulf %82, %84 : vector<2x64xf32>
    %88 = arith.addf %86, %87 : vector<2x64xf32>
    %89 = math.tanh %88 : vector<2x64xf32>
    %90 = arith.mulf %85, %89 : vector<2x64xf32>
    %91 = vector.extract_strided_slice %90 {offsets = [0, 32], sizes = [2, 32], strides = [1, 1]} : vector<2x64xf32> to vector<2x32xf32>
    %cst_15 = arith.constant dense<0.000000e+00> : vector<2x256xf32>
    %92 = tpu.matmul %90, %17, %cst_15 {dimension_numbers = #tpu.dot_dimension_numbers<[1], [0], [0], [1], [0, 0, 1, 1], [], []>} : vector<2x64xf32>, vector<64x256xf32>, vector<2x256xf32> -> vector<2x256xf32>
    %93 = vector.extract_strided_slice %23 {offsets = [8, 0], sizes = [2, 256], strides = [1, 1]} : vector<16x256xf32> to vector<2x256xf32>
    %94 = arith.addf %93, %92 : vector<2x256xf32>
    %95 = arith.mulf %8, %94 : vector<2x256xf32>
    %96 = math.tanh %95 : vector<2x256xf32>
    %97 = arith.mulf %8, %96 : vector<2x256xf32>
    %98 = arith.addf %97, %11 : vector<2x256xf32>
    %99 = vector.extract_strided_slice %98 {offsets = [0, 0], sizes = [2, 64], strides = [1, 1]} : vector<2x256xf32> to vector<2x64xf32>
    %100 = vector.extract_strided_slice %98 {offsets = [0, 64], sizes = [2, 64], strides = [1, 1]} : vector<2x256xf32> to vector<2x64xf32>
    %101 = vector.extract_strided_slice %98 {offsets = [0, 128], sizes = [2, 64], strides = [1, 1]} : vector<2x256xf32> to vector<2x64xf32>
    %102 = vector.extract_strided_slice %98 {offsets = [0, 192], sizes = [2, 64], strides = [1, 1]} : vector<2x256xf32> to vector<2x64xf32>
    %103 = arith.mulf %100, %88 : vector<2x64xf32>
    %104 = arith.mulf %99, %101 : vector<2x64xf32>
    %105 = arith.addf %103, %104 : vector<2x64xf32>
    %106 = math.tanh %105 : vector<2x64xf32>
    %107 = arith.mulf %102, %106 : vector<2x64xf32>
    %108 = vector.extract_strided_slice %107 {offsets = [0, 32], sizes = [2, 32], strides = [1, 1]} : vector<2x64xf32> to vector<2x32xf32>
    %cst_16 = arith.constant dense<0.000000e+00> : vector<2x256xf32>
    %109 = tpu.matmul %107, %17, %cst_16 {dimension_numbers = #tpu.dot_dimension_numbers<[1], [0], [0], [1], [0, 0, 1, 1], [], []>} : vector<2x64xf32>, vector<64x256xf32>, vector<2x256xf32> -> vector<2x256xf32>
    %110 = vector.extract_strided_slice %23 {offsets = [10, 0], sizes = [2, 256], strides = [1, 1]} : vector<16x256xf32> to vector<2x256xf32>
    %111 = arith.addf %110, %109 : vector<2x256xf32>
    %112 = arith.mulf %8, %111 : vector<2x256xf32>
    %113 = math.tanh %112 : vector<2x256xf32>
    %114 = arith.mulf %8, %113 : vector<2x256xf32>
    %115 = arith.addf %114, %11 : vector<2x256xf32>
    %116 = vector.extract_strided_slice %115 {offsets = [0, 0], sizes = [2, 64], strides = [1, 1]} : vector<2x256xf32> to vector<2x64xf32>
    %117 = vector.extract_strided_slice %115 {offsets = [0, 64], sizes = [2, 64], strides = [1, 1]} : vector<2x256xf32> to vector<2x64xf32>
    %118 = vector.extract_strided_slice %115 {offsets = [0, 128], sizes = [2, 64], strides = [1, 1]} : vector<2x256xf32> to vector<2x64xf32>
    %119 = vector.extract_strided_slice %115 {offsets = [0, 192], sizes = [2, 64], strides = [1, 1]} : vector<2x256xf32> to vector<2x64xf32>
    %120 = arith.mulf %117, %105 : vector<2x64xf32>
    %121 = arith.mulf %116, %118 : vector<2x64xf32>
    %122 = arith.addf %120, %121 : vector<2x64xf32>
    %123 = math.tanh %122 : vector<2x64xf32>
    %124 = arith.mulf %119, %123 : vector<2x64xf32>
    %125 = vector.extract_strided_slice %124 {offsets = [0, 32], sizes = [2, 32], strides = [1, 1]} : vector<2x64xf32> to vector<2x32xf32>
    %cst_17 = arith.constant dense<0.000000e+00> : vector<2x256xf32>
    %126 = tpu.matmul %124, %17, %cst_17 {dimension_numbers = #tpu.dot_dimension_numbers<[1], [0], [0], [1], [0, 0, 1, 1], [], []>} : vector<2x64xf32>, vector<64x256xf32>, vector<2x256xf32> -> vector<2x256xf32>
    %127 = vector.extract_strided_slice %23 {offsets = [12, 0], sizes = [2, 256], strides = [1, 1]} : vector<16x256xf32> to vector<2x256xf32>
    %128 = arith.addf %127, %126 : vector<2x256xf32>
    %129 = arith.mulf %8, %128 : vector<2x256xf32>
    %130 = math.tanh %129 : vector<2x256xf32>
    %131 = arith.mulf %8, %130 : vector<2x256xf32>
    %132 = arith.addf %131, %11 : vector<2x256xf32>
    %133 = vector.extract_strided_slice %132 {offsets = [0, 0], sizes = [2, 64], strides = [1, 1]} : vector<2x256xf32> to vector<2x64xf32>
    %134 = vector.extract_strided_slice %132 {offsets = [0, 64], sizes = [2, 64], strides = [1, 1]} : vector<2x256xf32> to vector<2x64xf32>
    %135 = vector.extract_strided_slice %132 {offsets = [0, 128], sizes = [2, 64], strides = [1, 1]} : vector<2x256xf32> to vector<2x64xf32>
    %136 = vector.extract_strided_slice %132 {offsets = [0, 192], sizes = [2, 64], strides = [1, 1]} : vector<2x256xf32> to vector<2x64xf32>
    %137 = arith.mulf %134, %122 : vector<2x64xf32>
    %138 = arith.mulf %133, %135 : vector<2x64xf32>
    %139 = arith.addf %137, %138 : vector<2x64xf32>
    %140 = math.tanh %139 : vector<2x64xf32>
    %141 = arith.mulf %136, %140 : vector<2x64xf32>
    %142 = vector.extract_strided_slice %141 {offsets = [0, 32], sizes = [2, 32], strides = [1, 1]} : vector<2x64xf32> to vector<2x32xf32>
    %cst_18 = arith.constant dense<0.000000e+00> : vector<2x256xf32>
    %143 = tpu.matmul %141, %17, %cst_18 {dimension_numbers = #tpu.dot_dimension_numbers<[1], [0], [0], [1], [0, 0, 1, 1], [], []>} : vector<2x64xf32>, vector<64x256xf32>, vector<2x256xf32> -> vector<2x256xf32>
    %144 = vector.extract_strided_slice %23 {offsets = [14, 0], sizes = [2, 256], strides = [1, 1]} : vector<16x256xf32> to vector<2x256xf32>
    %145 = arith.addf %144, %143 : vector<2x256xf32>
    %146 = arith.mulf %8, %145 : vector<2x256xf32>
    %147 = math.tanh %146 : vector<2x256xf32>
    %148 = arith.mulf %8, %147 : vector<2x256xf32>
    %149 = arith.addf %148, %11 : vector<2x256xf32>
    %150 = vector.extract_strided_slice %149 {offsets = [0, 0], sizes = [2, 64], strides = [1, 1]} : vector<2x256xf32> to vector<2x64xf32>
    %151 = vector.extract_strided_slice %149 {offsets = [0, 64], sizes = [2, 64], strides = [1, 1]} : vector<2x256xf32> to vector<2x64xf32>
    %152 = vector.extract_strided_slice %149 {offsets = [0, 128], sizes = [2, 64], strides = [1, 1]} : vector<2x256xf32> to vector<2x64xf32>
    %153 = vector.extract_strided_slice %149 {offsets = [0, 192], sizes = [2, 64], strides = [1, 1]} : vector<2x256xf32> to vector<2x64xf32>
    %154 = arith.mulf %151, %139 : vector<2x64xf32>
    %155 = arith.mulf %150, %152 : vector<2x64xf32>
    %156 = arith.addf %154, %155 : vector<2x64xf32>
    %157 = math.tanh %156 : vector<2x64xf32>
    %158 = arith.mulf %153, %157 : vector<2x64xf32>
    %159 = vector.extract_strided_slice %158 {offsets = [0, 32], sizes = [2, 32], strides = [1, 1]} : vector<2x64xf32> to vector<2x32xf32>
    %cst_19 = arith.constant dense<0.000000e+00> : vector<2x256xf32>
    %160 = tpu.matmul %158, %17, %cst_19 {dimension_numbers = #tpu.dot_dimension_numbers<[1], [0], [0], [1], [0, 0, 1, 1], [], []>} : vector<2x64xf32>, vector<64x256xf32>, vector<2x256xf32> -> vector<2x256xf32>
    %c0_20 = arith.constant 0 : index
    %c0_21 = arith.constant 0 : index
    %161 = vector.load %arg2[%c0_20, %c0_21] : memref<1x256xf32, #tpu.memory_space<vmem>>, vector<1x256xf32>
    %162 = vector.broadcast %161 : vector<1x256xf32> to vector<2x256xf32>
    %163 = arith.addf %162, %160 : vector<2x256xf32>
    %164 = arith.mulf %8, %163 : vector<2x256xf32>
    %165 = math.tanh %164 : vector<2x256xf32>
    %166 = arith.mulf %8, %165 : vector<2x256xf32>
    %167 = arith.addf %166, %11 : vector<2x256xf32>
    %168 = vector.extract_strided_slice %167 {offsets = [0, 0], sizes = [2, 64], strides = [1, 1]} : vector<2x256xf32> to vector<2x64xf32>
    %169 = vector.extract_strided_slice %167 {offsets = [0, 64], sizes = [2, 64], strides = [1, 1]} : vector<2x256xf32> to vector<2x64xf32>
    %170 = vector.extract_strided_slice %167 {offsets = [0, 128], sizes = [2, 64], strides = [1, 1]} : vector<2x256xf32> to vector<2x64xf32>
    %171 = vector.extract_strided_slice %167 {offsets = [0, 192], sizes = [2, 64], strides = [1, 1]} : vector<2x256xf32> to vector<2x64xf32>
    %172 = arith.mulf %169, %156 : vector<2x64xf32>
    %173 = arith.mulf %168, %170 : vector<2x64xf32>
    %174 = arith.addf %172, %173 : vector<2x64xf32>
    %175 = math.tanh %174 : vector<2x64xf32>
    %176 = arith.mulf %171, %175 : vector<2x64xf32>
    %177 = vector.extract_strided_slice %176 {offsets = [0, 32], sizes = [2, 32], strides = [1, 1]} : vector<2x64xf32> to vector<2x32xf32>
    %cst_22 = arith.constant 0.000000e+00 : f32
    %178 = vector.broadcast %cst_22 : f32 to vector<2x128xf32>
    %179 = vector.extract_strided_slice %57 {offsets = [0, 0], sizes = [1, 32], strides = [1, 1]} : vector<2x32xf32> to vector<1x32xf32>
    %180 = vector.extract_strided_slice %125 {offsets = [0, 0], sizes = [1, 32], strides = [1, 1]} : vector<2x32xf32> to vector<1x32xf32>
    %181 = tpu.concatenate %179, %180 in 0 : vector<1x32xf32>, vector<1x32xf32> -> vector<2x32xf32>
    %c0_23 = arith.constant 0 : index
    %c0_24 = arith.constant 0 : index
    %182 = vector.load %arg4[%c0_23, %c0_24] : memref<256x128xf32, #tpu.memory_space<vmem>>, vector<32x128xf32>
    %cst_25 = arith.constant dense<0.000000e+00> : vector<2x128xf32>
    %183 = tpu.matmul %181, %182, %cst_25 {dimension_numbers = #tpu.dot_dimension_numbers<[1], [0], [0], [1], [0, 0, 1, 1], [], []>} : vector<2x32xf32>, vector<32x128xf32>, vector<2x128xf32> -> vector<2x128xf32>
    %184 = arith.addf %178, %183 : vector<2x128xf32>
    %185 = vector.extract_strided_slice %57 {offsets = [1, 0], sizes = [1, 32], strides = [1, 1]} : vector<2x32xf32> to vector<1x32xf32>
    %186 = vector.extract_strided_slice %125 {offsets = [1, 0], sizes = [1, 32], strides = [1, 1]} : vector<2x32xf32> to vector<1x32xf32>
    %187 = tpu.concatenate %185, %186 in 0 : vector<1x32xf32>, vector<1x32xf32> -> vector<2x32xf32>
    %c32 = arith.constant 32 : index
    %c0_26 = arith.constant 0 : index
    %188 = vector.load %arg4[%c32, %c0_26] : memref<256x128xf32, #tpu.memory_space<vmem>>, vector<32x128xf32>
    %cst_27 = arith.constant dense<0.000000e+00> : vector<2x128xf32>
    %189 = tpu.matmul %187, %188, %cst_27 {dimension_numbers = #tpu.dot_dimension_numbers<[1], [0], [0], [1], [0, 0, 1, 1], [], []>} : vector<2x32xf32>, vector<32x128xf32>, vector<2x128xf32> -> vector<2x128xf32>
    %190 = arith.addf %184, %189 : vector<2x128xf32>
    %191 = vector.extract_strided_slice %74 {offsets = [0, 0], sizes = [1, 32], strides = [1, 1]} : vector<2x32xf32> to vector<1x32xf32>
    %192 = vector.extract_strided_slice %142 {offsets = [0, 0], sizes = [1, 32], strides = [1, 1]} : vector<2x32xf32> to vector<1x32xf32>
    %193 = tpu.concatenate %191, %192 in 0 : vector<1x32xf32>, vector<1x32xf32> -> vector<2x32xf32>
    %c64 = arith.constant 64 : index
    %c0_28 = arith.constant 0 : index
    %194 = vector.load %arg4[%c64, %c0_28] : memref<256x128xf32, #tpu.memory_space<vmem>>, vector<32x128xf32>
    %cst_29 = arith.constant dense<0.000000e+00> : vector<2x128xf32>
    %195 = tpu.matmul %193, %194, %cst_29 {dimension_numbers = #tpu.dot_dimension_numbers<[1], [0], [0], [1], [0, 0, 1, 1], [], []>} : vector<2x32xf32>, vector<32x128xf32>, vector<2x128xf32> -> vector<2x128xf32>
    %196 = arith.addf %190, %195 : vector<2x128xf32>
    %197 = vector.extract_strided_slice %74 {offsets = [1, 0], sizes = [1, 32], strides = [1, 1]} : vector<2x32xf32> to vector<1x32xf32>
    %198 = vector.extract_strided_slice %142 {offsets = [1, 0], sizes = [1, 32], strides = [1, 1]} : vector<2x32xf32> to vector<1x32xf32>
    %199 = tpu.concatenate %197, %198 in 0 : vector<1x32xf32>, vector<1x32xf32> -> vector<2x32xf32>
    %c96 = arith.constant 96 : index
    %c0_30 = arith.constant 0 : index
    %200 = vector.load %arg4[%c96, %c0_30] : memref<256x128xf32, #tpu.memory_space<vmem>>, vector<32x128xf32>
    %cst_31 = arith.constant dense<0.000000e+00> : vector<2x128xf32>
    %201 = tpu.matmul %199, %200, %cst_31 {dimension_numbers = #tpu.dot_dimension_numbers<[1], [0], [0], [1], [0, 0, 1, 1], [], []>} : vector<2x32xf32>, vector<32x128xf32>, vector<2x128xf32> -> vector<2x128xf32>
    %202 = arith.addf %196, %201 : vector<2x128xf32>
    %203 = vector.extract_strided_slice %91 {offsets = [0, 0], sizes = [1, 32], strides = [1, 1]} : vector<2x32xf32> to vector<1x32xf32>
    %204 = vector.extract_strided_slice %159 {offsets = [0, 0], sizes = [1, 32], strides = [1, 1]} : vector<2x32xf32> to vector<1x32xf32>
    %205 = tpu.concatenate %203, %204 in 0 : vector<1x32xf32>, vector<1x32xf32> -> vector<2x32xf32>
    %c128 = arith.constant 128 : index
    %c0_32 = arith.constant 0 : index
    %206 = vector.load %arg4[%c128, %c0_32] : memref<256x128xf32, #tpu.memory_space<vmem>>, vector<32x128xf32>
    %cst_33 = arith.constant dense<0.000000e+00> : vector<2x128xf32>
    %207 = tpu.matmul %205, %206, %cst_33 {dimension_numbers = #tpu.dot_dimension_numbers<[1], [0], [0], [1], [0, 0, 1, 1], [], []>} : vector<2x32xf32>, vector<32x128xf32>, vector<2x128xf32> -> vector<2x128xf32>
    %208 = arith.addf %202, %207 : vector<2x128xf32>
    %209 = vector.extract_strided_slice %91 {offsets = [1, 0], sizes = [1, 32], strides = [1, 1]} : vector<2x32xf32> to vector<1x32xf32>
    %210 = vector.extract_strided_slice %159 {offsets = [1, 0], sizes = [1, 32], strides = [1, 1]} : vector<2x32xf32> to vector<1x32xf32>
    %211 = tpu.concatenate %209, %210 in 0 : vector<1x32xf32>, vector<1x32xf32> -> vector<2x32xf32>
    %c160 = arith.constant 160 : index
    %c0_34 = arith.constant 0 : index
    %212 = vector.load %arg4[%c160, %c0_34] : memref<256x128xf32, #tpu.memory_space<vmem>>, vector<32x128xf32>
    %cst_35 = arith.constant dense<0.000000e+00> : vector<2x128xf32>
    %213 = tpu.matmul %211, %212, %cst_35 {dimension_numbers = #tpu.dot_dimension_numbers<[1], [0], [0], [1], [0, 0, 1, 1], [], []>} : vector<2x32xf32>, vector<32x128xf32>, vector<2x128xf32> -> vector<2x128xf32>
    %214 = arith.addf %208, %213 : vector<2x128xf32>
    %215 = vector.extract_strided_slice %108 {offsets = [0, 0], sizes = [1, 32], strides = [1, 1]} : vector<2x32xf32> to vector<1x32xf32>
    %216 = vector.extract_strided_slice %177 {offsets = [0, 0], sizes = [1, 32], strides = [1, 1]} : vector<2x32xf32> to vector<1x32xf32>
    %217 = tpu.concatenate %215, %216 in 0 : vector<1x32xf32>, vector<1x32xf32> -> vector<2x32xf32>
    %c192 = arith.constant 192 : index
    %c0_36 = arith.constant 0 : index
    %218 = vector.load %arg4[%c192, %c0_36] : memref<256x128xf32, #tpu.memory_space<vmem>>, vector<32x128xf32>
    %cst_37 = arith.constant dense<0.000000e+00> : vector<2x128xf32>
    %219 = tpu.matmul %217, %218, %cst_37 {dimension_numbers = #tpu.dot_dimension_numbers<[1], [0], [0], [1], [0, 0, 1, 1], [], []>} : vector<2x32xf32>, vector<32x128xf32>, vector<2x128xf32> -> vector<2x128xf32>
    %220 = arith.addf %214, %219 : vector<2x128xf32>
    %221 = vector.extract_strided_slice %108 {offsets = [1, 0], sizes = [1, 32], strides = [1, 1]} : vector<2x32xf32> to vector<1x32xf32>
    %222 = vector.extract_strided_slice %177 {offsets = [1, 0], sizes = [1, 32], strides = [1, 1]} : vector<2x32xf32> to vector<1x32xf32>
    %223 = tpu.concatenate %221, %222 in 0 : vector<1x32xf32>, vector<1x32xf32> -> vector<2x32xf32>
    %c224 = arith.constant 224 : index
    %c0_38 = arith.constant 0 : index
    %224 = vector.load %arg4[%c224, %c0_38] : memref<256x128xf32, #tpu.memory_space<vmem>>, vector<32x128xf32>
    %cst_39 = arith.constant dense<0.000000e+00> : vector<2x128xf32>
    %225 = tpu.matmul %223, %224, %cst_39 {dimension_numbers = #tpu.dot_dimension_numbers<[1], [0], [0], [1], [0, 0, 1, 1], [], []>} : vector<2x32xf32>, vector<32x128xf32>, vector<2x128xf32> -> vector<2x128xf32>
    %226 = arith.addf %220, %225 : vector<2x128xf32>
    %c0_40 = arith.constant 0 : index
    %c0_41 = arith.constant 0 : index
    %227 = vector.load %arg5[%c0_40, %c0_41] : memref<1x128xf32, #tpu.memory_space<vmem>>, vector<1x128xf32>
    %228 = vector.broadcast %227 : vector<1x128xf32> to vector<2x128xf32>
    %229 = arith.addf %226, %228 : vector<2x128xf32>
    %c0_42 = arith.constant 0 : index
    %c0_43 = arith.constant 0 : index
    %230 = vector.load %arg6[%c0_42, %c0_43] : memref<2x128xf32, #tpu.memory_space<vmem>>, vector<2x128xf32>
    tpu.vector_store %arg6[%c0_42, %c0_43], %229 {strides = array<i32>} : memref<2x128xf32, #tpu.memory_space<vmem>>, vector<2x128xf32>,
    return
  }
}

</mosaic_0001>

<llo_original>
// kernel: lstm_model_forward.1
$region0: #{lstm_model_forward.1}
  #allocation0 [shape = 'u32[]', space=smem, size = 0x4, offset = 0x4, fixed_abs, tag = 'smem constant byte address 0x4 - core index']
  #allocation1 [shape = 'u32[144,128]{1,0:T(1,128)}', space=vmem, size = 0x12000, scoped, tag = 'internal scratch']
  %s0 = inlined_call_operand.vmem [shape: f32[16,32], index: 0, kind: input, shape index: {}]
  %s1 = inlined_call_operand.vmem [shape: f32[32,256], index: 1, kind: input, shape index: {}]
  %s2 = inlined_call_operand.vmem [shape: f32[1,256], index: 2, kind: input, shape index: {}]
  %s3 = inlined_call_operand.vmem [shape: f32[64,256], index: 3, kind: input, shape index: {}]
  %s4 = inlined_call_operand.vmem [shape: f32[256,128], index: 4, kind: input, shape index: {}]
  %s5 = inlined_call_operand.vmem [shape: f32[1,128], index: 5, kind: input, shape index: {}]
  %s6 = inlined_call_operand.hbm [shape: f32[2,128], index: 6, kind: output, shape index: {}]
  %s7 = sld [smem:[#allocation0]]
  $region34: #{lstm_model_forward.1} parent=0
    _
  %s9 = ssub.s32 1, %s7
  %s10 = scalar_select 0, %s9, %s7
  $region1: #{lstm_model_forward.1} parent=0
    #allocation2 [shape = 'u8[1024]{0}', space=vmem, size = 0x400, scoped, tag = 'output window, operand 0, single buffered']
    #allocation3 [shape = 's32[1]{0}', space=sflag, size = 0x4, scoped, tag = 'scoped memory for lstm_model_forward.1']
    %11 = vsyncpa [#allocation3], 0
    // Predicated region
    $region2: #{lstm_model_forward.1} parent=1 // pred_check
      _
    $region3: #{lstm_model_forward.1} parent=1 // pred_check_branch
      %13 = sbr.rel (0) target = $region5
    $region4: #{lstm_model_forward.1} parent=1 // pred_region
      _
    $region5: #{lstm_model_forward.1} parent=1 // pred_fallthru
      _
    // Predicated region
    $region6: #{lstm_model_forward.1} parent=1 // pred_check
      _
    $region7: #{lstm_model_forward.1} parent=1 // pred_check_branch
      %15 = sbr.rel (0) target = $region9
    $region8: #{lstm_model_forward.1} parent=1 // pred_region
      _
    $region9: #{lstm_model_forward.1} parent=1 // pred_fallthru
      _
    // Predicated region
    $region10: #{lstm_model_forward.1} parent=1 // pred_check
      _
    $region11: #{lstm_model_forward.1} parent=1 // pred_check_branch
      %17 = sbr.rel (0) target = $region13
    $region12: #{lstm_model_forward.1} parent=1 // pred_region
      _
    $region13: #{lstm_model_forward.1} parent=1 // pred_fallthru
      _
    // Predicated region
    $region14: #{lstm_model_forward.1} parent=1 // pred_check
      _
    $region15: #{lstm_model_forward.1} parent=1 // pred_check_branch
      %19 = sbr.rel (0) target = $region17
    $region16: #{lstm_model_forward.1} parent=1 // pred_region
      _
    $region17: #{lstm_model_forward.1} parent=1 // pred_fallthru
      _
    // Predicated region
    $region18: #{lstm_model_forward.1} parent=1 // pred_check
      _
    $region19: #{lstm_model_forward.1} parent=1 // pred_check_branch
      %21 = sbr.rel (0) target = $region21
    $region20: #{lstm_model_forward.1} parent=1 // pred_region
      _
    $region21: #{lstm_model_forward.1} parent=1 // pred_fallthru
      _
    // Predicated region
    $region22: #{lstm_model_forward.1} parent=1 // pred_check
      _
    $region23: #{lstm_model_forward.1} parent=1 // pred_check_branch
      %23 = sbr.rel (0) target = $region25
    $region24: #{lstm_model_forward.1} parent=1 // pred_region
      _
    $region25: #{lstm_model_forward.1} parent=1 // pred_fallthru
      _
    %v24 = vlaneseq
    %v25 = vand.u32 %v24, 127
    %v26 = vadd.s32 %v25, 128
    %vm27 = vcmp.ge.s32.totalorder %v25, 128
    %vm28 = vcmp.ge.s32.totalorder %v26, 128
    %vm29 = vcmp.lt.s32.totalorder %v25, 192
    %vm30 = vcmp.lt.s32.totalorder %v26, 192
    %vm31 = vmand %vm27, %vm29
    %vm32 = vmand %vm28, %vm30
    %v33 = vsel %vm31, 1.0, 0.5
    %v34 = vsel %vm32, 1.0, 0.5
    %v35 = vsel %vm31, 0.0, 0.5
    %v36 = vsel %vm32, 0.0, 0.5
    %vm37 = vcmp.lt.s32.totalorder %v25, 32
    %v38 = vsel %vm37, 1, 0
    %v39 = vcvt.s32.f32 %v38
    %v40 = vld [vmem:[%s3] sm:$0xff]
    %v41 = vld [vmem:[%s3 + $0x8] sm:$0xff]
    %v42 = vld [vmem:[%s3 + $0x10] sm:$0xff]
    %v43 = vld [vmem:[%s3 + $0x18] sm:$0xff]
    %v44 = vld [vmem:[%s3 + $0x20] sm:$0xff]
    %v45 = vld [vmem:[%s3 + $0x28] sm:$0xff]
    %v46 = vld [vmem:[%s3 + $0x30] sm:$0xff]
    %v47 = vld [vmem:[%s3 + $0x38] sm:$0xff]
    %v48 = vld [vmem:[%s3 + $0x40] sm:$0xff]
    %v49 = vld [vmem:[%s3 + $0x48] sm:$0xff]
    %v50 = vld [vmem:[%s3 + $0x50] sm:$0xff]
    %v51 = vld [vmem:[%s3 + $0x58] sm:$0xff]
    %v52 = vld [vmem:[%s3 + $0x60] sm:$0xff]
    %v53 = vld [vmem:[%s3 + $0x68] sm:$0xff]
    %v54 = vld [vmem:[%s3 + $0x70] sm:$0xff]
    %v55 = vld [vmem:[%s3 + $0x78] sm:$0xff]
    %v56 = vld [vmem:[%s0] sm:$0xff]
    %v57 = vld [vmem:[%s0 + $0x8] sm:$0xff]
    %v58 = vld [vmem:[%s1] sm:$0xff]
    %v59 = vld [vmem:[%s1 + $0x8] sm:$0xff]
    %v60 = vld [vmem:[%s1 + $0x10] sm:$0xff]
    %v61 = vld [vmem:[%s1 + $0x18] sm:$0xff]
    %v62 = vld [vmem:[%s1 + $0x20] sm:$0xff]
    %v63 = vld [vmem:[%s1 + $0x28] sm:$0xff]
    %v64 = vld [vmem:[%s1 + $0x30] sm:$0xff]
    %v65 = vld [vmem:[%s1 + $0x38] sm:$0xff]
    %v66 = vld [vmem:[%s2] sm:$0x3]
    %v68 = vlaneseq
    %v69 = vshrl.u32 %v68, 7
    %v70 = vsub.s32 0, %v69
    %v71 = vrot.slane %v66, %v70
    %v72 = vlaneseq
    %v73 = vshrl.u32 %v72, 7
    %v74 = vsub.s32 1, %v73
    %v75 = vrot.slane %v66, %v74
    %vm78 = vcmask 261120
    %v80 = vsel %vm78, %v56, 0
    %v83 = vsel %vm78, %v57, 0
    %85 = vmatprep.subr.mxu0 %v59
    %86 = vmatpush1.msra.mxu0 %v58
    %87 = vmatprep.subr.mxu0 %v61
    %88 = vmatpush1.msra.mxu0 %v60
    %89 = vmatprep.subr.mxu0 %v63
    %90 = vmatpush1.msra.mxu0 %v62
    %91 = vmatprep.subr.mxu0 %v65
    %92 = vmatpush1.msra.mxu0 %v64
    %93 = vmatprep.subr.mxu0 0.0
    %94 = vmatpush1.msra.mxu0 0.0
    %95 = vmatprep.subr.mxu0 0.0
    %96 = vmatpush1.msra.mxu0 0.0
    %97 = vmatprep.subr.mxu0 0.0
    %98 = vmatpush1.msra.mxu0 0.0
    %99 = vmatprep.subr.mxu0 0.0
    %100 = vmatpush1.msra.mxu0 0.0
    %101 = vmatprep.subr.mxu0 0.0
    %102 = vmatpush1.msra.mxu0 0.0
    %103 = vmatprep.subr.mxu0 0.0
    %104 = vmatpush1.msra.mxu0 0.0
    %105 = vmatprep.subr.mxu0 0.0
    %106 = vmatpush1.msra.mxu0 0.0
    %107 = vmatprep.subr.mxu0 0.0
    %108 = vmatpush1.msra.mxu0 0.0
    %109 = vmatprep.subr.mxu0 0.0
    %110 = vmatpush1.msra.mxu0 0.0
    %111 = vmatprep.subr.mxu0 0.0
    %112 = vmatpush1.msra.mxu0 0.0
    %113 = vmatprep.subr.mxu0 0.0
    %114 = vmatpush1.msra.mxu0 0.0
    %115 = vmatprep.subr.mxu0 0.0
    %116 = vmatpush1.msra.mxu0 0.0
    %117 = vmatprep.subr.mxu0 0.0
    %118 = vmatpush1.msra.mxu0 0.0
    %119 = vmatprep.subr.mxu0 0.0
    %120 = vmatpush1.msra.mxu0 0.0
    %121 = vmatprep.subr.mxu0 0.0
    %122 = vmatpush1.msra.mxu0 0.0
    %123 = vmatprep.subr.mxu0 0.0
    %124 = vmatpush1.msra.mxu0 0.0
    %125 = vmatprep.subr.mxu0 0.0
    %126 = vmatpush1.msra.mxu0 0.0
    %127 = vmatprep.subr.mxu0 0.0
    %128 = vmatpush1.msra.mxu0 0.0
    %129 = vmatprep.subr.mxu0 0.0
    %130 = vmatpush1.msra.mxu0 0.0
    %131 = vmatprep.subr.mxu0 0.0
    %132 = vmatpush1.msra.mxu0 0.0
    %133 = vmatprep.subr.mxu0 0.0
    %134 = vmatpush1.msra.mxu0 0.0
    %135 = vmatprep.subr.mxu0 0.0
    %136 = vmatpush1.msra.mxu0 0.0
    %137 = vmatprep.subr.mxu0 0.0
    %138 = vmatpush1.msra.mxu0 0.0
    %139 = vmatprep.subr.mxu0 0.0
    %140 = vmatpush1.msra.mxu0 0.0
    %141 = vmatprep.subr.mxu0 0.0
    %142 = vmatpush1.msra.mxu0 0.0
    %143 = vmatprep.subr.mxu0 0.0
    %144 = vmatpush1.msra.mxu0 0.0
    %145 = vmatprep.subr.mxu0 0.0
    %146 = vmatpush1.msra.mxu0 0.0
    %147 = vmatprep.subr.mxu0 0.0
    %148 = vmatpush1.msra.mxu0 0.0
    %149 = vmatprep.mubr.f32.mxu0 0.0
    %150 = vmatmul.mubr.f32.gmra.mrb[0].mxu0 %v80
    %v151 = vpop.f32.mrb[0].mxu0
    %v152 = vadd.f32 %v71, %v151
    %v153 = vpop.f32.mrb[0].mxu0
    %v154 = vadd.f32 %v75, %v153
    %155 = vmatprep.mubr.f32.mxu0 0.0
    %156 = vmatmul.mubr.f32.gmra.mrb[0].mxu0 %v83
    %v157 = vpop.f32.mrb[0].mxu0
    %v158 = vadd.f32 %v71, %v157
    %v159 = vpop.f32.mrb[0].mxu0
    %v160 = vadd.f32 %v75, %v159
    %161 = vdwg.mxu0
    %v162 = vmul.f32 %v33, %v152
    %v163 = vmul.f32 %v34, %v154
    %v164 = vtanh.pop %v162
    %v165 = vtanh.pop %v163
    %v166 = vmul.f32 %v33, %v164
    %v167 = vmul.f32 %v34, %v165
    %v168 = vadd.f32 %v166, %v35
    %v169 = vadd.f32 %v167, %v36
    %v170 = vmul.f32 %v168, 0.0
    %v171 = vmul.f32 %v168, %v169
    %173 = vrot.lane.b32.xlu0 %v171, 64
    %v174 = vpop.permute.xlu0 %173
    %v176 = vadd.f32 %v170, %v174
    %v177 = vtanh.pop %v176
    %v178 = vmul.f32 %v169, %v177
    %180 = vrot.lane.b32.xlu0 %v39, 64
    %v181 = vpop.permute.xlu0 %180
    %v183 = vmul.f32 %v176, %v181
    %v184 = vmul.f32 %v178, %v181
    %186 = vrot.lane.b32.xlu0 %v184, 64
    %v187 = vpop.permute.xlu0 %186
    %vm188 = vcmask 523264
    %v189 = vsel %vm188, %v187, 0
    %191 = vmatprep.subr.mxu0 %v41
    %192 = vmatpush1.msra.mxu0 %v40
    %193 = vmatprep.subr.mxu0 %v43
    %194 = vmatpush1.msra.mxu0 %v42
    %195 = vmatprep.subr.mxu0 %v45
    %196 = vmatpush1.msra.mxu0 %v44
    %197 = vmatprep.subr.mxu0 %v47
    %198 = vmatpush1.msra.mxu0 %v46
    %199 = vmatprep.subr.mxu0 %v49
    %200 = vmatpush1.msra.mxu0 %v48
    %201 = vmatprep.subr.mxu0 %v51
    %202 = vmatpush1.msra.mxu0 %v50
    %203 = vmatprep.subr.mxu0 %v53
    %204 = vmatpush1.msra.mxu0 %v52
    %205 = vmatprep.subr.mxu0 %v55
    %206 = vmatpush1.msra.mxu0 %v54
    %207 = vmatprep.subr.mxu0 0.0
    %208 = vmatpush1.msra.mxu0 0.0
    %209 = vmatprep.subr.mxu0 0.0
    %210 = vmatpush1.msra.mxu0 0.0
    %211 = vmatprep.subr.mxu0 0.0
    %212 = vmatpush1.msra.mxu0 0.0
    %213 = vmatprep.subr.mxu0 0.0
    %214 = vmatpush1.msra.mxu0 0.0
    %215 = vmatprep.subr.mxu0 0.0
    %216 = vmatpush1.msra.mxu0 0.0
    %217 = vmatprep.subr.mxu0 0.0
    %218 = vmatpush1.msra.mxu0 0.0
    %219 = vmatprep.subr.mxu0 0.0
    %220 = vmatpush1.msra.mxu0 0.0
    %221 = vmatprep.subr.mxu0 0.0
    %222 = vmatpush1.msra.mxu0 0.0
    %223 = vmatprep.subr.mxu0 0.0
    %224 = vmatpush1.msra.mxu0 0.0
    %225 = vmatprep.subr.mxu0 0.0
    %226 = vmatpush1.msra.mxu0 0.0
    %227 = vmatprep.subr.mxu0 0.0
    %228 = vmatpush1.msra.mxu0 0.0
    %229 = vmatprep.subr.mxu0 0.0
    %230 = vmatpush1.msra.mxu0 0.0
    %231 = vmatprep.subr.mxu0 0.0
    %232 = vmatpush1.msra.mxu0 0.0
    %233 = vmatprep.subr.mxu0 0.0
    %234 = vmatpush1.msra.mxu0 0.0
    %235 = vmatprep.subr.mxu0 0.0
    %236 = vmatpush1.msra.mxu0 0.0
    %237 = vmatprep.subr.mxu0 0.0
    %238 = vmatpush1.msra.mxu0 0.0
    %239 = vmatprep.subr.mxu0 0.0
    %240 = vmatpush1.msra.mxu0 0.0
    %241 = vmatprep.subr.mxu0 0.0
    %242 = vmatpush1.msra.mxu0 0.0
    %243 = vmatprep.subr.mxu0 0.0
    %244 = vmatpush1.msra.mxu0 0.0
    %245 = vmatprep.subr.mxu0 0.0
    %246 = vmatpush1.msra.mxu0 0.0
    %247 = vmatprep.subr.mxu0 0.0
    %248 = vmatpush1.msra.mxu0 0.0
    %249 = vmatprep.subr.mxu0 0.0
    %250 = vmatpush1.msra.mxu0 0.0
    %251 = vmatprep.subr.mxu0 0.0
    %252 = vmatpush1.msra.mxu0 0.0
    %253 = vmatprep.subr.mxu0 0.0
    %254 = vmatpush1.msra.mxu0 0.0
    %255 = vmatprep.mubr.f32.mxu0 0.0
    %256 = vmatmul.mubr.f32.gmra.mrb[0].mxu0 %v189
    %v257 = vpop.f32.mrb[0].mxu0
    %v258 = vadd.f32 0.0, %v257
    %v259 = vpop.f32.mrb[0].mxu0
    %v260 = vadd.f32 0.0, %v259
    %261 = vdwg.mxu0
    %v264 = vrot.slane %v258, 6
    %v265 = vrot.slane %v260, 6
    %v268 = vadd.f32 %v152, %v264
    %v269 = vadd.f32 %v154, %v265
    %v270 = vmul.f32 %v33, %v268
    %v271 = vmul.f32 %v34, %v269
    %v272 = vtanh.pop %v270
    %v273 = vtanh.pop %v271
    %v274 = vmul.f32 %v33, %v272
    %v275 = vmul.f32 %v34, %v273
    %v276 = vadd.f32 %v274, %v35
    %v277 = vadd.f32 %v275, %v36
    %v279 = vrot.slane %v183, 6
    %v281 = vmul.f32 %v276, %v279
    %v282 = vmul.f32 %v276, %v277
    %284 = vrot.lane.b32.xlu0 %v282, 64
    %v285 = vpop.permute.xlu0 %284
    %v287 = vadd.f32 %v281, %v285
    %v288 = vtanh.pop %v287
    %v289 = vmul.f32 %v277, %v288
    %v291 = vrot.slane %v289, 2
    %292 = vrot.lane.b32.xlu0 %v291, 64
    %v293 = vpop.permute.xlu0 %292
    %v294 = vsel %vm188, %v293, 0
    %296 = vmatprep.subr.mxu0 %v41
    %297 = vmatpush1.msra.mxu0 %v40
    %298 = vmatprep.subr.mxu0 %v43
    %299 = vmatpush1.msra.mxu0 %v42
    %300 = vmatprep.subr.mxu0 %v45
    %301 = vmatpush1.msra.mxu0 %v44
    %302 = vmatprep.subr.mxu0 %v47
    %303 = vmatpush1.msra.mxu0 %v46
    %304 = vmatprep.subr.mxu0 %v49
    %305 = vmatpush1.msra.mxu0 %v48
    %306 = vmatprep.subr.mxu0 %v51
    %307 = vmatpush1.msra.mxu0 %v50
    %308 = vmatprep.subr.mxu0 %v53
    %309 = vmatpush1.msra.mxu0 %v52
    %310 = vmatprep.subr.mxu0 %v55
    %311 = vmatpush1.msra.mxu0 %v54
    %312 = vmatprep.subr.mxu0 0.0
    %313 = vmatpush1.msra.mxu0 0.0
    %314 = vmatprep.subr.mxu0 0.0
    %315 = vmatpush1.msra.mxu0 0.0
    %316 = vmatprep.subr.mxu0 0.0
    %317 = vmatpush1.msra.mxu0 0.0
    %318 = vmatprep.subr.mxu0 0.0
    %319 = vmatpush1.msra.mxu0 0.0
    %320 = vmatprep.subr.mxu0 0.0
    %321 = vmatpush1.msra.mxu0 0.0
    %322 = vmatprep.subr.mxu0 0.0
    %323 = vmatpush1.msra.mxu0 0.0
    %324 = vmatprep.subr.mxu0 0.0
    %325 = vmatpush1.msra.mxu0 0.0
    %326 = vmatprep.subr.mxu0 0.0
    %327 = vmatpush1.msra.mxu0 0.0
    %328 = vmatprep.subr.mxu0 0.0
    %329 = vmatpush1.msra.mxu0 0.0
    %330 = vmatprep.subr.mxu0 0.0
    %331 = vmatpush1.msra.mxu0 0.0
    %332 = vmatprep.subr.mxu0 0.0
    %333 = vmatpush1.msra.mxu0 0.0
    %334 = vmatprep.subr.mxu0 0.0
    %335 = vmatpush1.msra.mxu0 0.0
    %336 = vmatprep.subr.mxu0 0.0
    %337 = vmatpush1.msra.mxu0 0.0
    %338 = vmatprep.subr.mxu0 0.0
    %339 = vmatpush1.msra.mxu0 0.0
    %340 = vmatprep.subr.mxu0 0.0
    %341 = vmatpush1.msra.mxu0 0.0
    %342 = vmatprep.subr.mxu0 0.0
    %343 = vmatpush1.msra.mxu0 0.0
    %344 = vmatprep.subr.mxu0 0.0
    %345 = vmatpush1.msra.mxu0 0.0
    %346 = vmatprep.subr.mxu0 0.0
    %347 = vmatpush1.msra.mxu0 0.0
    %348 = vmatprep.subr.mxu0 0.0
    %349 = vmatpush1.msra.mxu0 0.0
    %350 = vmatprep.subr.mxu0 0.0
    %351 = vmatpush1.msra.mxu0 0.0
    %352 = vmatprep.subr.mxu0 0.0
    %353 = vmatpush1.msra.mxu0 0.0
    %354 = vmatprep.subr.mxu0 0.0
    %355 = vmatpush1.msra.mxu0 0.0
    %356 = vmatprep.subr.mxu0 0.0
    %357 = vmatpush1.msra.mxu0 0.0
    %358 = vmatprep.subr.mxu0 0.0
    %359 = vmatpush1.msra.mxu0 0.0
    %360 = vmatprep.mubr.f32.mxu0 0.0
    %361 = vmatmul.mubr.f32.gmra.mrb[0].mxu0 %v294
    %v362 = vpop.f32.mrb[0].mxu0
    %v363 = vadd.f32 0.0, %v362
    %v364 = vpop.f32.mrb[0].mxu0
    %v365 = vadd.f32 0.0, %v364
    %366 = vdwg.mxu0
    %v369 = vrot.slane %v363, 4
    %v370 = vrot.slane %v365, 4
    %v373 = vadd.f32 %v152, %v369
    %v374 = vadd.f32 %v154, %v370
    %v375 = vmul.f32 %v33, %v373
    %v376 = vmul.f32 %v34, %v374
    %v377 = vtanh.pop %v375
    %v378 = vtanh.pop %v376
    %v379 = vmul.f32 %v33, %v377
    %v380 = vmul.f32 %v34, %v378
    %v381 = vadd.f32 %v379, %v35
    %v382 = vadd.f32 %v380, %v36
    %v384 = vrot.slane %v287, 6
    %v386 = vmul.f32 %v381, %v384
    %v387 = vmul.f32 %v381, %v382
    %389 = vrot.lane.b32.xlu0 %v387, 64
    %v390 = vpop.permute.xlu0 %389
    %v392 = vadd.f32 %v386, %v390
    %v393 = vtanh.pop %v392
    %v394 = vmul.f32 %v382, %v393
    %v396 = vrot.slane %v394, 4
    %397 = vrot.lane.b32.xlu0 %v396, 64
    %v398 = vpop.permute.xlu0 %397
    %v399 = vsel %vm188, %v398, 0
    %401 = vmatprep.subr.mxu0 %v41
    %402 = vmatpush1.msra.mxu0 %v40
    %403 = vmatprep.subr.mxu0 %v43
    %404 = vmatpush1.msra.mxu0 %v42
    %405 = vmatprep.subr.mxu0 %v45
    %406 = vmatpush1.msra.mxu0 %v44
    %407 = vmatprep.subr.mxu0 %v47
    %408 = vmatpush1.msra.mxu0 %v46
    %409 = vmatprep.subr.mxu0 %v49
    %410 = vmatpush1.msra.mxu0 %v48
    %411 = vmatprep.subr.mxu0 %v51
    %412 = vmatpush1.msra.mxu0 %v50
    %413 = vmatprep.subr.mxu0 %v53
    %414 = vmatpush1.msra.mxu0 %v52
    %415 = vmatprep.subr.mxu0 %v55
    %416 = vmatpush1.msra.mxu0 %v54
    %417 = vmatprep.subr.mxu0 0.0
    %418 = vmatpush1.msra.mxu0 0.0
    %419 = vmatprep.subr.mxu0 0.0
    %420 = vmatpush1.msra.mxu0 0.0
    %421 = vmatprep.subr.mxu0 0.0
    %422 = vmatpush1.msra.mxu0 0.0
    %423 = vmatprep.subr.mxu0 0.0
    %424 = vmatpush1.msra.mxu0 0.0
    %425 = vmatprep.subr.mxu0 0.0
    %426 = vmatpush1.msra.mxu0 0.0
    %427 = vmatprep.subr.mxu0 0.0
    %428 = vmatpush1.msra.mxu0 0.0
    %429 = vmatprep.subr.mxu0 0.0
    %430 = vmatpush1.msra.mxu0 0.0
    %431 = vmatprep.subr.mxu0 0.0
    %432 = vmatpush1.msra.mxu0 0.0
    %433 = vmatprep.subr.mxu0 0.0
    %434 = vmatpush1.msra.mxu0 0.0
    %435 = vmatprep.subr.mxu0 0.0
    %436 = vmatpush1.msra.mxu0 0.0
    %437 = vmatprep.subr.mxu0 0.0
    %438 = vmatpush1.msra.mxu0 0.0
    %439 = vmatprep.subr.mxu0 0.0
    %440 = vmatpush1.msra.mxu0 0.0
    %441 = vmatprep.subr.mxu0 0.0
    %442 = vmatpush1.msra.mxu0 0.0
    %443 = vmatprep.subr.mxu0 0.0
    %444 = vmatpush1.msra.mxu0 0.0
    %445 = vmatprep.subr.mxu0 0.0
    %446 = vmatpush1.msra.mxu0 0.0
    %447 = vmatprep.subr.mxu0 0.0
    %448 = vmatpush1.msra.mxu0 0.0
    %449 = vmatprep.subr.mxu0 0.0
    %450 = vmatpush1.msra.mxu0 0.0
    %451 = vmatprep.subr.mxu0 0.0
    %452 = vmatpush1.msra.mxu0 0.0
    %453 = vmatprep.subr.mxu0 0.0
    %454 = vmatpush1.msra.mxu0 0.0
    %455 = vmatprep.subr.mxu0 0.0
    %456 = vmatpush1.msra.mxu0 0.0
    %457 = vmatprep.subr.mxu0 0.0
    %458 = vmatpush1.msra.mxu0 0.0
    %459 = vmatprep.subr.mxu0 0.0
    %460 = vmatpush1.msra.mxu0 0.0
    %461 = vmatprep.subr.mxu0 0.0
    %462 = vmatpush1.msra.mxu0 0.0
    %463 = vmatprep.subr.mxu0 0.0
    %464 = vmatpush1.msra.mxu0 0.0
    %465 = vmatprep.mubr.f32.mxu0 0.0
    %466 = vmatmul.mubr.f32.gmra.mrb[0].mxu0 %v399
    %v467 = vpop.f32.mrb[0].mxu0
    %v468 = vadd.f32 0.0, %v467
    %v469 = vpop.f32.mrb[0].mxu0
    %v470 = vadd.f32 0.0, %v469
    %471 = vdwg.mxu0
    %v474 = vrot.slane %v468, 2
    %v475 = vrot.slane %v470, 2
    %v478 = vadd.f32 %v152, %v474
    %v479 = vadd.f32 %v154, %v475
    %v480 = vmul.f32 %v33, %v478
    %v481 = vmul.f32 %v34, %v479
    %v482 = vtanh.pop %v480
    %v483 = vtanh.pop %v481
    %v484 = vmul.f32 %v33, %v482
    %v485 = vmul.f32 %v34, %v483
    %v486 = vadd.f32 %v484, %v35
    %v487 = vadd.f32 %v485, %v36
    %v489 = vrot.slane %v392, 6
    %v491 = vmul.f32 %v486, %v489
    %v492 = vmul.f32 %v486, %v487
    %494 = vrot.lane.b32.xlu0 %v492, 64
    %v495 = vpop.permute.xlu0 %494
    %v497 = vadd.f32 %v491, %v495
    %v498 = vtanh.pop %v497
    %v499 = vmul.f32 %v487, %v498
    %v501 = vrot.slane %v499, 6
    %502 = vrot.lane.b32.xlu0 %v501, 64
    %v503 = vpop.permute.xlu0 %502
    %v504 = vsel %vm188, %v503, 0
    %506 = vmatprep.subr.mxu0 %v41
    %507 = vmatpush1.msra.mxu0 %v40
    %508 = vmatprep.subr.mxu0 %v43
    %509 = vmatpush1.msra.mxu0 %v42
    %510 = vmatprep.subr.mxu0 %v45
    %511 = vmatpush1.msra.mxu0 %v44
    %512 = vmatprep.subr.mxu0 %v47
    %513 = vmatpush1.msra.mxu0 %v46
    %514 = vmatprep.subr.mxu0 %v49
    %515 = vmatpush1.msra.mxu0 %v48
    %516 = vmatprep.subr.mxu0 %v51
    %517 = vmatpush1.msra.mxu0 %v50
    %518 = vmatprep.subr.mxu0 %v53
    %519 = vmatpush1.msra.mxu0 %v52
    %520 = vmatprep.subr.mxu0 %v55
    %521 = vmatpush1.msra.mxu0 %v54
    %522 = vmatprep.subr.mxu0 0.0
    %523 = vmatpush1.msra.mxu0 0.0
    %524 = vmatprep.subr.mxu0 0.0
    %525 = vmatpush1.msra.mxu0 0.0
    %526 = vmatprep.subr.mxu0 0.0
    %527 = vmatpush1.msra.mxu0 0.0
    %528 = vmatprep.subr.mxu0 0.0
    %529 = vmatpush1.msra.mxu0 0.0
    %530 = vmatprep.subr.mxu0 0.0
    %531 = vmatpush1.msra.mxu0 0.0
    %532 = vmatprep.subr.mxu0 0.0
    %533 = vmatpush1.msra.mxu0 0.0
    %534 = vmatprep.subr.mxu0 0.0
    %535 = vmatpush1.msra.mxu0 0.0
    %536 = vmatprep.subr.mxu0 0.0
    %537 = vmatpush1.msra.mxu0 0.0
    %538 = vmatprep.subr.mxu0 0.0
    %539 = vmatpush1.msra.mxu0 0.0
    %540 = vmatprep.subr.mxu0 0.0
    %541 = vmatpush1.msra.mxu0 0.0
    %542 = vmatprep.subr.mxu0 0.0
    %543 = vmatpush1.msra.mxu0 0.0
    %544 = vmatprep.subr.mxu0 0.0
    %545 = vmatpush1.msra.mxu0 0.0
    %546 = vmatprep.subr.mxu0 0.0
    %547 = vmatpush1.msra.mxu0 0.0
    %548 = vmatprep.subr.mxu0 0.0
    %549 = vmatpush1.msra.mxu0 0.0
    %550 = vmatprep.subr.mxu0 0.0
    %551 = vmatpush1.msra.mxu0 0.0
    %552 = vmatprep.subr.mxu0 0.0
    %553 = vmatpush1.msra.mxu0 0.0
    %554 = vmatprep.subr.mxu0 0.0
    %555 = vmatpush1.msra.mxu0 0.0
    %556 = vmatprep.subr.mxu0 0.0
    %557 = vmatpush1.msra.mxu0 0.0
    %558 = vmatprep.subr.mxu0 0.0
    %559 = vmatpush1.msra.mxu0 0.0
    %560 = vmatprep.subr.mxu0 0.0
    %561 = vmatpush1.msra.mxu0 0.0
    %562 = vmatprep.subr.mxu0 0.0
    %563 = vmatpush1.msra.mxu0 0.0
    %564 = vmatprep.subr.mxu0 0.0
    %565 = vmatpush1.msra.mxu0 0.0
    %566 = vmatprep.subr.mxu0 0.0
    %567 = vmatpush1.msra.mxu0 0.0
    %568 = vmatprep.subr.mxu0 0.0
    %569 = vmatpush1.msra.mxu0 0.0
    %570 = vmatprep.mubr.f32.mxu0 0.0
    %571 = vmatmul.mubr.f32.gmra.mrb[0].mxu0 %v504
    %v572 = vpop.f32.mrb[0].mxu0
    %v573 = vadd.f32 0.0, %v572
    %v574 = vpop.f32.mrb[0].mxu0
    %v575 = vadd.f32 0.0, %v574
    %576 = vdwg.mxu0
    %v577 = vadd.f32 %v158, %v573
    %v578 = vadd.f32 %v160, %v575
    %v579 = vmul.f32 %v33, %v577
    %v580 = vmul.f32 %v34, %v578
    %v581 = vtanh.pop %v579
    %v582 = vtanh.pop %v580
    %v583 = vmul.f32 %v33, %v581
    %v584 = vmul.f32 %v34, %v582
    %v585 = vadd.f32 %v583, %v35
    %v586 = vadd.f32 %v584, %v36
    %v588 = vrot.slane %v497, 6
    %v590 = vmul.f32 %v585, %v588
    %v591 = vmul.f32 %v585, %v586
    %593 = vrot.lane.b32.xlu0 %v591, 64
    %v594 = vpop.permute.xlu0 %593
    %v596 = vadd.f32 %v590, %v594
    %v597 = vtanh.pop %v596
    %v598 = vmul.f32 %v586, %v597
    %600 = vrot.lane.b32.xlu0 %v598, 64
    %v601 = vpop.permute.xlu0 %600
    %v602 = vsel %vm188, %v601, 0
    %604 = vmatprep.subr.mxu0 %v41
    %605 = vmatpush1.msra.mxu0 %v40
    %606 = vmatprep.subr.mxu0 %v43
    %607 = vmatpush1.msra.mxu0 %v42
    %608 = vmatprep.subr.mxu0 %v45
    %609 = vmatpush1.msra.mxu0 %v44
    %610 = vmatprep.subr.mxu0 %v47
    %611 = vmatpush1.msra.mxu0 %v46
    %612 = vmatprep.subr.mxu0 %v49
    %613 = vmatpush1.msra.mxu0 %v48
    %614 = vmatprep.subr.mxu0 %v51
    %615 = vmatpush1.msra.mxu0 %v50
    %616 = vmatprep.subr.mxu0 %v53
    %617 = vmatpush1.msra.mxu0 %v52
    %618 = vmatprep.subr.mxu0 %v55
    %619 = vmatpush1.msra.mxu0 %v54
    %620 = vmatprep.subr.mxu0 0.0
    %621 = vmatpush1.msra.mxu0 0.0
    %622 = vmatprep.subr.mxu0 0.0
    %623 = vmatpush1.msra.mxu0 0.0
    %624 = vmatprep.subr.mxu0 0.0
    %625 = vmatpush1.msra.mxu0 0.0
    %626 = vmatprep.subr.mxu0 0.0
    %627 = vmatpush1.msra.mxu0 0.0
    %628 = vmatprep.subr.mxu0 0.0
    %629 = vmatpush1.msra.mxu0 0.0
    %630 = vmatprep.subr.mxu0 0.0
    %631 = vmatpush1.msra.mxu0 0.0
    %632 = vmatprep.subr.mxu0 0.0
    %633 = vmatpush1.msra.mxu0 0.0
    %634 = vmatprep.subr.mxu0 0.0
    %635 = vmatpush1.msra.mxu0 0.0
    %636 = vmatprep.subr.mxu0 0.0
    %637 = vmatpush1.msra.mxu0 0.0
    %638 = vmatprep.subr.mxu0 0.0
    %639 = vmatpush1.msra.mxu0 0.0
    %640 = vmatprep.subr.mxu0 0.0
    %641 = vmatpush1.msra.mxu0 0.0
    %642 = vmatprep.subr.mxu0 0.0
    %643 = vmatpush1.msra.mxu0 0.0
    %644 = vmatprep.subr.mxu0 0.0
    %645 = vmatpush1.msra.mxu0 0.0
    %646 = vmatprep.subr.mxu0 0.0
    %647 = vmatpush1.msra.mxu0 0.0
    %648 = vmatprep.subr.mxu0 0.0
    %649 = vmatpush1.msra.mxu0 0.0
    %650 = vmatprep.subr.mxu0 0.0
    %651 = vmatpush1.msra.mxu0 0.0
    %652 = vmatprep.subr.mxu0 0.0
    %653 = vmatpush1.msra.mxu0 0.0
    %654 = vmatprep.subr.mxu0 0.0
    %655 = vmatpush1.msra.mxu0 0.0
    %656 = vmatprep.subr.mxu0 0.0
    %657 = vmatpush1.msra.mxu0 0.0
    %658 = vmatprep.subr.mxu0 0.0
    %659 = vmatpush1.msra.mxu0 0.0
    %660 = vmatprep.subr.mxu0 0.0
    %661 = vmatpush1.msra.mxu0 0.0
    %662 = vmatprep.subr.mxu0 0.0
    %663 = vmatpush1.msra.mxu0 0.0
    %664 = vmatprep.subr.mxu0 0.0
    %665 = vmatpush1.msra.mxu0 0.0
    %666 = vmatprep.subr.mxu0 0.0
    %667 = vmatpush1.msra.mxu0 0.0
    %668 = vmatprep.mubr.f32.mxu0 0.0
    %669 = vmatmul.mubr.f32.gmra.mrb[0].mxu0 %v602
    %v670 = vpop.f32.mrb[0].mxu0
    %v671 = vadd.f32 0.0, %v670
    %v672 = vpop.f32.mrb[0].mxu0
    %v673 = vadd.f32 0.0, %v672
    %674 = vdwg.mxu0
    %v677 = vrot.slane %v671, 6
    %v678 = vrot.slane %v673, 6
    %v681 = vadd.f32 %v158, %v677
    %v682 = vadd.f32 %v160, %v678
    %v683 = vmul.f32 %v33, %v681
    %v684 = vmul.f32 %v34, %v682
    %v685 = vtanh.pop %v683
    %v686 = vtanh.pop %v684
    %v687 = vmul.f32 %v33, %v685
    %v688 = vmul.f32 %v34, %v686
    %v689 = vadd.f32 %v687, %v35
    %v690 = vadd.f32 %v688, %v36
    %v692 = vrot.slane %v596, 6
    %v694 = vmul.f32 %v689, %v692
    %v695 = vmul.f32 %v689, %v690
    %697 = vrot.lane.b32.xlu0 %v695, 64
    %v698 = vpop.permute.xlu0 %697
    %v700 = vadd.f32 %v694, %v698
    %v701 = vtanh.pop %v700
    %v702 = vmul.f32 %v690, %v701
    %v704 = vrot.slane %v702, 2
    %705 = vrot.lane.b32.xlu0 %v704, 64
    %v706 = vpop.permute.xlu0 %705
    %v707 = vsel %vm188, %v706, 0
    %709 = vmatprep.subr.mxu0 %v41
    %710 = vmatpush1.msra.mxu0 %v40
    %711 = vmatprep.subr.mxu0 %v43
    %712 = vmatpush1.msra.mxu0 %v42
    %713 = vmatprep.subr.mxu0 %v45
    %714 = vmatpush1.msra.mxu0 %v44
    %715 = vmatprep.subr.mxu0 %v47
    %716 = vmatpush1.msra.mxu0 %v46
    %717 = vmatprep.subr.mxu0 %v49
    %718 = vmatpush1.msra.mxu0 %v48
    %719 = vmatprep.subr.mxu0 %v51
    %720 = vmatpush1.msra.mxu0 %v50
    %721 = vmatprep.subr.mxu0 %v53
    %722 = vmatpush1.msra.mxu0 %v52
    %723 = vmatprep.subr.mxu0 %v55
    %724 = vmatpush1.msra.mxu0 %v54
    %725 = vmatprep.subr.mxu0 0.0
    %726 = vmatpush1.msra.mxu0 0.0
    %727 = vmatprep.subr.mxu0 0.0
    %728 = vmatpush1.msra.mxu0 0.0
    %729 = vmatprep.subr.mxu0 0.0
    %730 = vmatpush1.msra.mxu0 0.0
    %731 = vmatprep.subr.mxu0 0.0
    %732 = vmatpush1.msra.mxu0 0.0
    %733 = vmatprep.subr.mxu0 0.0
    %734 = vmatpush1.msra.mxu0 0.0
    %735 = vmatprep.subr.mxu0 0.0
    %736 = vmatpush1.msra.mxu0 0.0
    %737 = vmatprep.subr.mxu0 0.0
    %738 = vmatpush1.msra.mxu0 0.0
    %739 = vmatprep.subr.mxu0 0.0
    %740 = vmatpush1.msra.mxu0 0.0
    %741 = vmatprep.subr.mxu0 0.0
    %742 = vmatpush1.msra.mxu0 0.0
    %743 = vmatprep.subr.mxu0 0.0
    %744 = vmatpush1.msra.mxu0 0.0
    %745 = vmatprep.subr.mxu0 0.0
    %746 = vmatpush1.msra.mxu0 0.0
    %747 = vmatprep.subr.mxu0 0.0
    %748 = vmatpush1.msra.mxu0 0.0
    %749 = vmatprep.subr.mxu0 0.0
    %750 = vmatpush1.msra.mxu0 0.0
    %751 = vmatprep.subr.mxu0 0.0
    %752 = vmatpush1.msra.mxu0 0.0
    %753 = vmatprep.subr.mxu0 0.0
    %754 = vmatpush1.msra.mxu0 0.0
    %755 = vmatprep.subr.mxu0 0.0
    %756 = vmatpush1.msra.mxu0 0.0
    %757 = vmatprep.subr.mxu0 0.0
    %758 = vmatpush1.msra.mxu0 0.0
    %759 = vmatprep.subr.mxu0 0.0
    %760 = vmatpush1.msra.mxu0 0.0
    %761 = vmatprep.subr.mxu0 0.0
    %762 = vmatpush1.msra.mxu0 0.0
    %763 = vmatprep.subr.mxu0 0.0
    %764 = vmatpush1.msra.mxu0 0.0
    %765 = vmatprep.subr.mxu0 0.0
    %766 = vmatpush1.msra.mxu0 0.0
    %767 = vmatprep.subr.mxu0 0.0
    %768 = vmatpush1.msra.mxu0 0.0
    %769 = vmatprep.subr.mxu0 0.0
    %770 = vmatpush1.msra.mxu0 0.0
    %771 = vmatprep.subr.mxu0 0.0
    %772 = vmatpush1.msra.mxu0 0.0
    %773 = vmatprep.mubr.f32.mxu0 0.0
    %774 = vmatmul.mubr.f32.gmra.mrb[0].mxu0 %v707
    %v775 = vpop.f32.mrb[0].mxu0
    %v776 = vadd.f32 0.0, %v775
    %v777 = vpop.f32.mrb[0].mxu0
    %v778 = vadd.f32 0.0, %v777
    %779 = vdwg.mxu0
    %v782 = vrot.slane %v776, 4
    %v783 = vrot.slane %v778, 4
    %v786 = vadd.f32 %v158, %v782
    %v787 = vadd.f32 %v160, %v783
    %v788 = vmul.f32 %v33, %v786
    %v789 = vmul.f32 %v34, %v787
    %v790 = vtanh.pop %v788
    %v791 = vtanh.pop %v789
    %v792 = vmul.f32 %v33, %v790
    %v793 = vmul.f32 %v34, %v791
    %v794 = vadd.f32 %v792, %v35
    %v795 = vadd.f32 %v793, %v36
    %v797 = vrot.slane %v700, 6
    %v799 = vmul.f32 %v794, %v797
    %v800 = vmul.f32 %v794, %v795
    %802 = vrot.lane.b32.xlu0 %v800, 64
    %v803 = vpop.permute.xlu0 %802
    %v805 = vadd.f32 %v799, %v803
    %v806 = vtanh.pop %v805
    %v807 = vmul.f32 %v795, %v806
    %v809 = vrot.slane %v807, 4
    %810 = vrot.lane.b32.xlu0 %v809, 64
    %v811 = vpop.permute.xlu0 %810
    %v812 = vsel %vm188, %v811, 0
    %814 = vmatprep.subr.mxu0 %v41
    %815 = vmatpush1.msra.mxu0 %v40
    %816 = vmatprep.subr.mxu0 %v43
    %817 = vmatpush1.msra.mxu0 %v42
    %818 = vmatprep.subr.mxu0 %v45
    %819 = vmatpush1.msra.mxu0 %v44
    %820 = vmatprep.subr.mxu0 %v47
    %821 = vmatpush1.msra.mxu0 %v46
    %822 = vmatprep.subr.mxu0 %v49
    %823 = vmatpush1.msra.mxu0 %v48
    %824 = vmatprep.subr.mxu0 %v51
    %825 = vmatpush1.msra.mxu0 %v50
    %826 = vmatprep.subr.mxu0 %v53
    %827 = vmatpush1.msra.mxu0 %v52
    %828 = vmatprep.subr.mxu0 %v55
    %829 = vmatpush1.msra.mxu0 %v54
    %830 = vmatprep.subr.mxu0 0.0
    %831 = vmatpush1.msra.mxu0 0.0
    %832 = vmatprep.subr.mxu0 0.0
    %833 = vmatpush1.msra.mxu0 0.0
    %834 = vmatprep.subr.mxu0 0.0
    %835 = vmatpush1.msra.mxu0 0.0
    %836 = vmatprep.subr.mxu0 0.0
    %837 = vmatpush1.msra.mxu0 0.0
    %838 = vmatprep.subr.mxu0 0.0
    %839 = vmatpush1.msra.mxu0 0.0
    %840 = vmatprep.subr.mxu0 0.0
    %841 = vmatpush1.msra.mxu0 0.0
    %842 = vmatprep.subr.mxu0 0.0
    %843 = vmatpush1.msra.mxu0 0.0
    %844 = vmatprep.subr.mxu0 0.0
    %845 = vmatpush1.msra.mxu0 0.0
    %846 = vmatprep.subr.mxu0 0.0
    %847 = vmatpush1.msra.mxu0 0.0
    %848 = vmatprep.subr.mxu0 0.0
    %849 = vmatpush1.msra.mxu0 0.0
    %850 = vmatprep.subr.mxu0 0.0
    %851 = vmatpush1.msra.mxu0 0.0
    %852 = vmatprep.subr.mxu0 0.0
    %853 = vmatpush1.msra.mxu0 0.0
    %854 = vmatprep.subr.mxu0 0.0
    %855 = vmatpush1.msra.mxu0 0.0
    %856 = vmatprep.subr.mxu0 0.0
    %857 = vmatpush1.msra.mxu0 0.0
    %858 = vmatprep.subr.mxu0 0.0
    %859 = vmatpush1.msra.mxu0 0.0
    %860 = vmatprep.subr.mxu0 0.0
    %861 = vmatpush1.msra.mxu0 0.0
    %862 = vmatprep.subr.mxu0 0.0
    %863 = vmatpush1.msra.mxu0 0.0
    %864 = vmatprep.subr.mxu0 0.0
    %865 = vmatpush1.msra.mxu0 0.0
    %866 = vmatprep.subr.mxu0 0.0
    %867 = vmatpush1.msra.mxu0 0.0
    %868 = vmatprep.subr.mxu0 0.0
    %869 = vmatpush1.msra.mxu0 0.0
    %870 = vmatprep.subr.mxu0 0.0
    %871 = vmatpush1.msra.mxu0 0.0
    %872 = vmatprep.subr.mxu0 0.0
    %873 = vmatpush1.msra.mxu0 0.0
    %874 = vmatprep.subr.mxu0 0.0
    %875 = vmatpush1.msra.mxu0 0.0
    %876 = vmatprep.subr.mxu0 0.0
    %877 = vmatpush1.msra.mxu0 0.0
    %878 = vmatprep.mubr.f32.mxu0 0.0
    %879 = vmatmul.mubr.f32.gmra.mrb[0].mxu0 %v812
    %v880 = vpop.f32.mrb[0].mxu0
    %v881 = vadd.f32 0.0, %v880
    %v882 = vpop.f32.mrb[0].mxu0
    %v883 = vadd.f32 0.0, %v882
    %884 = vdwg.mxu0
    %v887 = vrot.slane %v881, 2
    %v888 = vrot.slane %v883, 2
    %v891 = vadd.f32 %v158, %v887
    %v892 = vadd.f32 %v160, %v888
    %v893 = vmul.f32 %v33, %v891
    %v894 = vmul.f32 %v34, %v892
    %v895 = vtanh.pop %v893
    %v896 = vtanh.pop %v894
    %v897 = vmul.f32 %v33, %v895
    %v898 = vmul.f32 %v34, %v896
    %v899 = vadd.f32 %v897, %v35
    %v900 = vadd.f32 %v898, %v36
    %v902 = vrot.slane %v805, 6
    %v904 = vmul.f32 %v899, %v902
    %v905 = vmul.f32 %v899, %v900
    %907 = vrot.lane.b32.xlu0 %v905, 64
    %v908 = vpop.permute.xlu0 %907
    %v910 = vadd.f32 %v904, %v908
    %v911 = vtanh.pop %v910
    %v912 = vmul.f32 %v900, %v911
    %v914 = vrot.slane %v912, 6
    %915 = vrot.lane.b32.xlu0 %v914, 64
    %v916 = vpop.permute.xlu0 %915
    %v917 = vsel %vm188, %v916, 0
    %919 = vmatprep.subr.mxu0 %v41
    %920 = vmatpush1.msra.mxu0 %v40
    %921 = vmatprep.subr.mxu0 %v43
    %922 = vmatpush1.msra.mxu0 %v42
    %923 = vmatprep.subr.mxu0 %v45
    %924 = vmatpush1.msra.mxu0 %v44
    %925 = vmatprep.subr.mxu0 %v47
    %926 = vmatpush1.msra.mxu0 %v46
    %927 = vmatprep.subr.mxu0 %v49
    %928 = vmatpush1.msra.mxu0 %v48
    %929 = vmatprep.subr.mxu0 %v51
    %930 = vmatpush1.msra.mxu0 %v50
    %931 = vmatprep.subr.mxu0 %v53
    %932 = vmatpush1.msra.mxu0 %v52
    %933 = vmatprep.subr.mxu0 %v55
    %934 = vmatpush1.msra.mxu0 %v54
    %935 = vmatprep.subr.mxu0 0.0
    %936 = vmatpush1.msra.mxu0 0.0
    %937 = vmatprep.subr.mxu0 0.0
    %938 = vmatpush1.msra.mxu0 0.0
    %939 = vmatprep.subr.mxu0 0.0
    %940 = vmatpush1.msra.mxu0 0.0
    %941 = vmatprep.subr.mxu0 0.0
    %942 = vmatpush1.msra.mxu0 0.0
    %943 = vmatprep.subr.mxu0 0.0
    %944 = vmatpush1.msra.mxu0 0.0
    %945 = vmatprep.subr.mxu0 0.0
    %946 = vmatpush1.msra.mxu0 0.0
    %947 = vmatprep.subr.mxu0 0.0
    %948 = vmatpush1.msra.mxu0 0.0
    %949 = vmatprep.subr.mxu0 0.0
    %950 = vmatpush1.msra.mxu0 0.0
    %951 = vmatprep.subr.mxu0 0.0
    %952 = vmatpush1.msra.mxu0 0.0
    %953 = vmatprep.subr.mxu0 0.0
    %954 = vmatpush1.msra.mxu0 0.0
    %955 = vmatprep.subr.mxu0 0.0
    %956 = vmatpush1.msra.mxu0 0.0
    %957 = vmatprep.subr.mxu0 0.0
    %958 = vmatpush1.msra.mxu0 0.0
    %959 = vmatprep.subr.mxu0 0.0
    %960 = vmatpush1.msra.mxu0 0.0
    %961 = vmatprep.subr.mxu0 0.0
    %962 = vmatpush1.msra.mxu0 0.0
    %963 = vmatprep.subr.mxu0 0.0
    %964 = vmatpush1.msra.mxu0 0.0
    %965 = vmatprep.subr.mxu0 0.0
    %966 = vmatpush1.msra.mxu0 0.0
    %967 = vmatprep.subr.mxu0 0.0
    %968 = vmatpush1.msra.mxu0 0.0
    %969 = vmatprep.subr.mxu0 0.0
    %970 = vmatpush1.msra.mxu0 0.0
    %971 = vmatprep.subr.mxu0 0.0
    %972 = vmatpush1.msra.mxu0 0.0
    %973 = vmatprep.subr.mxu0 0.0
    %974 = vmatpush1.msra.mxu0 0.0
    %975 = vmatprep.subr.mxu0 0.0
    %976 = vmatpush1.msra.mxu0 0.0
    %977 = vmatprep.subr.mxu0 0.0
    %978 = vmatpush1.msra.mxu0 0.0
    %979 = vmatprep.subr.mxu0 0.0
    %980 = vmatpush1.msra.mxu0 0.0
    %981 = vmatprep.subr.mxu0 0.0
    %982 = vmatpush1.msra.mxu0 0.0
    %983 = vmatprep.mubr.f32.mxu0 0.0
    %984 = vmatmul.mubr.f32.gmra.mrb[0].mxu0 %v917
    %v985 = vpop.f32.mrb[0].mxu0
    %v986 = vadd.f32 0.0, %v985
    %v987 = vpop.f32.mrb[0].mxu0
    %v988 = vadd.f32 0.0, %v987
    %989 = vdwg.mxu0
    %v990 = vadd.f32 %v71, %v986
    %v991 = vadd.f32 %v75, %v988
    %v992 = vmul.f32 %v33, %v990
    %v993 = vmul.f32 %v34, %v991
    %v994 = vtanh.pop %v992
    %v995 = vtanh.pop %v993
    %v996 = vmul.f32 %v33, %v994
    %v997 = vmul.f32 %v34, %v995
    %v998 = vadd.f32 %v996, %v35
    %v999 = vadd.f32 %v997, %v36
    %v1001 = vrot.slane %v910, 6
    %v1003 = vmul.f32 %v998, %v1001
    %v1004 = vmul.f32 %v998, %v999
    %1006 = vrot.lane.b32.xlu0 %v1004, 64
    %v1007 = vpop.permute.xlu0 %1006
    %v1009 = vadd.f32 %v1003, %v1007
    %v1010 = vtanh.pop %v1009
    %v1011 = vmul.f32 %v999, %v1010
    %v1013 = vrot.slane %v702, 1
    %vm1015 = vcmask 1040384
    %v1016 = vsel %vm1015, %v291, %v1013
    %v1017 = vld [vmem:[%s4] sm:$0xff]
    %v1018 = vld [vmem:[%s4 + $0x8] sm:$0xff]
    %v1019 = vld [vmem:[%s4 + $0x10] sm:$0xff]
    %v1020 = vld [vmem:[%s4 + $0x18] sm:$0xff]
    %v1021 = vrot.slane %v289, 3
    %v1024 = vsel %vm1015, %v1021, %v704
    %v1025 = vld [vmem:[%s4 + $0x20] sm:$0xff]
    %v1026 = vld [vmem:[%s4 + $0x28] sm:$0xff]
    %v1027 = vld [vmem:[%s4 + $0x30] sm:$0xff]
    %v1028 = vld [vmem:[%s4 + $0x38] sm:$0xff]
    %1030 = vrot.lane.b32.xlu0 %v1024, 32
    %v1031 = vpop.permute.xlu0 %1030
    %v1032 = vsel %vm78, %v1031, 0
    %1034 = vmatprep.subr.mxu0 0.0
    %1035 = vmatpush1.msra.mxu0 %v1025
    %1036 = vmatprep.subr.mxu0 0.0
    %1037 = vmatpush1.msra.mxu0 %v1026
    %1038 = vmatprep.subr.mxu0 0.0
    %1039 = vmatpush1.msra.mxu0 %v1027
    %1040 = vmatprep.subr.mxu0 0.0
    %1041 = vmatpush1.msra.mxu0 %v1028
    %1042 = vmatprep.subr.mxu0 0.0
    %1043 = vmatpush1.msra.mxu0 0.0
    %1044 = vmatprep.subr.mxu0 0.0
    %1045 = vmatpush1.msra.mxu0 0.0
    %1046 = vmatprep.subr.mxu0 0.0
    %1047 = vmatpush1.msra.mxu0 0.0
    %1048 = vmatprep.subr.mxu0 0.0
    %1049 = vmatpush1.msra.mxu0 0.0
    %1050 = vmatprep.subr.mxu0 0.0
    %1051 = vmatpush1.msra.mxu0 0.0
    %1052 = vmatprep.subr.mxu0 0.0
    %1053 = vmatpush1.msra.mxu0 0.0
    %1054 = vmatprep.subr.mxu0 0.0
    %1055 = vmatpush1.msra.mxu0 0.0
    %1056 = vmatprep.subr.mxu0 0.0
    %1057 = vmatpush1.msra.mxu0 0.0
    %1058 = vmatprep.subr.mxu0 0.0
    %1059 = vmatpush1.msra.mxu0 0.0
    %1060 = vmatprep.subr.mxu0 0.0
    %1061 = vmatpush1.msra.mxu0 0.0
    %1062 = vmatprep.subr.mxu0 0.0
    %1063 = vmatpush1.msra.mxu0 0.0
    %1064 = vmatprep.subr.mxu0 0.0
    %1065 = vmatpush1.msra.mxu0 0.0
    %1066 = vmatprep.subr.mxu0 0.0
    %1067 = vmatpush1.msra.mxu0 0.0
    %1068 = vmatprep.subr.mxu0 0.0
    %1069 = vmatpush1.msra.mxu0 0.0
    %1070 = vmatprep.subr.mxu0 0.0
    %1071 = vmatpush1.msra.mxu0 0.0
    %1072 = vmatprep.subr.mxu0 0.0
    %1073 = vmatpush1.msra.mxu0 0.0
    %1074 = vmatprep.subr.mxu0 0.0
    %1075 = vmatpush1.msra.mxu0 0.0
    %1076 = vmatprep.subr.mxu0 0.0
    %1077 = vmatpush1.msra.mxu0 0.0
    %1078 = vmatprep.subr.mxu0 0.0
    %1079 = vmatpush1.msra.mxu0 0.0
    %1080 = vmatprep.subr.mxu0 0.0
    %1081 = vmatpush1.msra.mxu0 0.0
    %1082 = vmatprep.subr.mxu0 0.0
    %1083 = vmatpush1.msra.mxu0 0.0
    %1084 = vmatprep.subr.mxu0 0.0
    %1085 = vmatpush1.msra.mxu0 0.0
    %1086 = vmatprep.subr.mxu0 0.0
    %1087 = vmatpush1.msra.mxu0 0.0
    %1088 = vmatprep.subr.mxu0 0.0
    %1089 = vmatpush1.msra.mxu0 0.0
    %1090 = vmatprep.subr.mxu0 0.0
    %1091 = vmatpush1.msra.mxu0 0.0
    %1092 = vmatprep.subr.mxu0 0.0
    %1093 = vmatpush1.msra.mxu0 0.0
    %1094 = vmatprep.subr.mxu0 0.0
    %1095 = vmatpush1.msra.mxu0 0.0
    %1096 = vmatprep.subr.mxu0 0.0
    %1097 = vmatpush1.msra.mxu0 0.0
    %1098 = vmatprep.mubr.f32.mxu0 0.0
    %1099 = vmatmul.mubr.f32.gmra.mrb[0].mxu0 %v1032
    %v1100 = vpop.f32.mrb[0].mxu0
    %v1101 = vadd.f32 0.0, %v1100
    %v1102 = vpop.f32.mrb[0].mxu0
    %1103 = vdwg.mxu0
    %1105 = vrot.lane.b32.xlu0 %v1016, 32
    %v1106 = vpop.permute.xlu0 %1105
    %v1107 = vsel %vm78, %v1106, 0
    %1109 = vmatprep.subr.mxu0 0.0
    %1110 = vmatpush1.msra.mxu0 %v1017
    %1111 = vmatprep.subr.mxu0 0.0
    %1112 = vmatpush1.msra.mxu0 %v1018
    %1113 = vmatprep.subr.mxu0 0.0
    %1114 = vmatpush1.msra.mxu0 %v1019
    %1115 = vmatprep.subr.mxu0 0.0
    %1116 = vmatpush1.msra.mxu0 %v1020
    %1117 = vmatprep.subr.mxu0 0.0
    %1118 = vmatpush1.msra.mxu0 0.0
    %1119 = vmatprep.subr.mxu0 0.0
    %1120 = vmatpush1.msra.mxu0 0.0
    %1121 = vmatprep.subr.mxu0 0.0
    %1122 = vmatpush1.msra.mxu0 0.0
    %1123 = vmatprep.subr.mxu0 0.0
    %1124 = vmatpush1.msra.mxu0 0.0
    %1125 = vmatprep.subr.mxu0 0.0
    %1126 = vmatpush1.msra.mxu0 0.0
    %1127 = vmatprep.subr.mxu0 0.0
    %1128 = vmatpush1.msra.mxu0 0.0
    %1129 = vmatprep.subr.mxu0 0.0
    %1130 = vmatpush1.msra.mxu0 0.0
    %1131 = vmatprep.subr.mxu0 0.0
    %1132 = vmatpush1.msra.mxu0 0.0
    %1133 = vmatprep.subr.mxu0 0.0
    %1134 = vmatpush1.msra.mxu0 0.0
    %1135 = vmatprep.subr.mxu0 0.0
    %1136 = vmatpush1.msra.mxu0 0.0
    %1137 = vmatprep.subr.mxu0 0.0
    %1138 = vmatpush1.msra.mxu0 0.0
    %1139 = vmatprep.subr.mxu0 0.0
    %1140 = vmatpush1.msra.mxu0 0.0
    %1141 = vmatprep.subr.mxu0 0.0
    %1142 = vmatpush1.msra.mxu0 0.0
    %1143 = vmatprep.subr.mxu0 0.0
    %1144 = vmatpush1.msra.mxu0 0.0
    %1145 = vmatprep.subr.mxu0 0.0
    %1146 = vmatpush1.msra.mxu0 0.0
    %1147 = vmatprep.subr.mxu0 0.0
    %1148 = vmatpush1.msra.mxu0 0.0
    %1149 = vmatprep.subr.mxu0 0.0
    %1150 = vmatpush1.msra.mxu0 0.0
    %1151 = vmatprep.subr.mxu0 0.0
    %1152 = vmatpush1.msra.mxu0 0.0
    %1153 = vmatprep.subr.mxu0 0.0
    %1154 = vmatpush1.msra.mxu0 0.0
    %1155 = vmatprep.subr.mxu0 0.0
    %1156 = vmatpush1.msra.mxu0 0.0
    %1157 = vmatprep.subr.mxu0 0.0
    %1158 = vmatpush1.msra.mxu0 0.0
    %1159 = vmatprep.subr.mxu0 0.0
    %1160 = vmatpush1.msra.mxu0 0.0
    %1161 = vmatprep.subr.mxu0 0.0
    %1162 = vmatpush1.msra.mxu0 0.0
    %1163 = vmatprep.subr.mxu0 0.0
    %1164 = vmatpush1.msra.mxu0 0.0
    %1165 = vmatprep.subr.mxu0 0.0
    %1166 = vmatpush1.msra.mxu0 0.0
    %1167 = vmatprep.subr.mxu0 0.0
    %1168 = vmatpush1.msra.mxu0 0.0
    %1169 = vmatprep.subr.mxu0 0.0
    %1170 = vmatpush1.msra.mxu0 0.0
    %1171 = vmatprep.subr.mxu0 0.0
    %1172 = vmatpush1.msra.mxu0 0.0
    %1173 = vmatprep.mubr.f32.mxu0 0.0
    %1174 = vmatmul.mubr.f32.gmra.mrb[0].mxu0 %v1107
    %v1175 = vpop.f32.mrb[0].mxu0
    %v1176 = vadd.f32 %v1101, %v1175
    %v1177 = vpop.f32.mrb[0].mxu0
    %1178 = vdwg.mxu0
    %v1180 = vrot.slane %v807, 3
    %v1182 = vsel %vm1015, %v396, %v1180
    %v1183 = vld [vmem:[%s4 + $0x40] sm:$0xff]
    %v1184 = vld [vmem:[%s4 + $0x48] sm:$0xff]
    %v1185 = vld [vmem:[%s4 + $0x50] sm:$0xff]
    %v1186 = vld [vmem:[%s4 + $0x58] sm:$0xff]
    %1188 = vrot.lane.b32.xlu0 %v1182, 32
    %v1189 = vpop.permute.xlu0 %1188
    %v1190 = vsel %vm78, %v1189, 0
    %1192 = vmatprep.subr.mxu0 0.0
    %1193 = vmatpush1.msra.mxu0 %v1183
    %1194 = vmatprep.subr.mxu0 0.0
    %1195 = vmatpush1.msra.mxu0 %v1184
    %1196 = vmatprep.subr.mxu0 0.0
    %1197 = vmatpush1.msra.mxu0 %v1185
    %1198 = vmatprep.subr.mxu0 0.0
    %1199 = vmatpush1.msra.mxu0 %v1186
    %1200 = vmatprep.subr.mxu0 0.0
    %1201 = vmatpush1.msra.mxu0 0.0
    %1202 = vmatprep.subr.mxu0 0.0
    %1203 = vmatpush1.msra.mxu0 0.0
    %1204 = vmatprep.subr.mxu0 0.0
    %1205 = vmatpush1.msra.mxu0 0.0
    %1206 = vmatprep.subr.mxu0 0.0
    %1207 = vmatpush1.msra.mxu0 0.0
    %1208 = vmatprep.subr.mxu0 0.0
    %1209 = vmatpush1.msra.mxu0 0.0
    %1210 = vmatprep.subr.mxu0 0.0
    %1211 = vmatpush1.msra.mxu0 0.0
    %1212 = vmatprep.subr.mxu0 0.0
    %1213 = vmatpush1.msra.mxu0 0.0
    %1214 = vmatprep.subr.mxu0 0.0
    %1215 = vmatpush1.msra.mxu0 0.0
    %1216 = vmatprep.subr.mxu0 0.0
    %1217 = vmatpush1.msra.mxu0 0.0
    %1218 = vmatprep.subr.mxu0 0.0
    %1219 = vmatpush1.msra.mxu0 0.0
    %1220 = vmatprep.subr.mxu0 0.0
    %1221 = vmatpush1.msra.mxu0 0.0
    %1222 = vmatprep.subr.mxu0 0.0
    %1223 = vmatpush1.msra.mxu0 0.0
    %1224 = vmatprep.subr.mxu0 0.0
    %1225 = vmatpush1.msra.mxu0 0.0
    %1226 = vmatprep.subr.mxu0 0.0
    %1227 = vmatpush1.msra.mxu0 0.0
    %1228 = vmatprep.subr.mxu0 0.0
    %1229 = vmatpush1.msra.mxu0 0.0
    %1230 = vmatprep.subr.mxu0 0.0
    %1231 = vmatpush1.msra.mxu0 0.0
    %1232 = vmatprep.subr.mxu0 0.0
    %1233 = vmatpush1.msra.mxu0 0.0
    %1234 = vmatprep.subr.mxu0 0.0
    %1235 = vmatpush1.msra.mxu0 0.0
    %1236 = vmatprep.subr.mxu0 0.0
    %1237 = vmatpush1.msra.mxu0 0.0
    %1238 = vmatprep.subr.mxu0 0.0
    %1239 = vmatpush1.msra.mxu0 0.0
    %1240 = vmatprep.subr.mxu0 0.0
    %1241 = vmatpush1.msra.mxu0 0.0
    %1242 = vmatprep.subr.mxu0 0.0
    %1243 = vmatpush1.msra.mxu0 0.0
    %1244 = vmatprep.subr.mxu0 0.0
    %1245 = vmatpush1.msra.mxu0 0.0
    %1246 = vmatprep.subr.mxu0 0.0
    %1247 = vmatpush1.msra.mxu0 0.0
    %1248 = vmatprep.subr.mxu0 0.0
    %1249 = vmatpush1.msra.mxu0 0.0
    %1250 = vmatprep.subr.mxu0 0.0
    %1251 = vmatpush1.msra.mxu0 0.0
    %1252 = vmatprep.subr.mxu0 0.0
    %1253 = vmatpush1.msra.mxu0 0.0
    %1254 = vmatprep.subr.mxu0 0.0
    %1255 = vmatpush1.msra.mxu0 0.0
    %1256 = vmatprep.mubr.f32.mxu0 0.0
    %1257 = vmatmul.mubr.f32.gmra.mrb[0].mxu0 %v1190
    %v1258 = vpop.f32.mrb[0].mxu0
    %v1259 = vadd.f32 0.0, %v1258
    %v1260 = vpop.f32.mrb[0].mxu0
    %1261 = vdwg.mxu0
    %v1262 = vadd.f32 %v1176, %v1259
    %v1263 = vrot.slane %v394, 5
    %v1266 = vsel %vm1015, %v1263, %v809
    %v1267 = vld [vmem:[%s4 + $0x60] sm:$0xff]
    %v1268 = vld [vmem:[%s4 + $0x68] sm:$0xff]
    %v1269 = vld [vmem:[%s4 + $0x70] sm:$0xff]
    %v1270 = vld [vmem:[%s4 + $0x78] sm:$0xff]
    %1272 = vrot.lane.b32.xlu0 %v1266, 32
    %v1273 = vpop.permute.xlu0 %1272
    %v1274 = vsel %vm78, %v1273, 0
    %1276 = vmatprep.subr.mxu0 0.0
    %1277 = vmatpush1.msra.mxu0 %v1267
    %1278 = vmatprep.subr.mxu0 0.0
    %1279 = vmatpush1.msra.mxu0 %v1268
    %1280 = vmatprep.subr.mxu0 0.0
    %1281 = vmatpush1.msra.mxu0 %v1269
    %1282 = vmatprep.subr.mxu0 0.0
    %1283 = vmatpush1.msra.mxu0 %v1270
    %1284 = vmatprep.subr.mxu0 0.0
    %1285 = vmatpush1.msra.mxu0 0.0
    %1286 = vmatprep.subr.mxu0 0.0
    %1287 = vmatpush1.msra.mxu0 0.0
    %1288 = vmatprep.subr.mxu0 0.0
    %1289 = vmatpush1.msra.mxu0 0.0
    %1290 = vmatprep.subr.mxu0 0.0
    %1291 = vmatpush1.msra.mxu0 0.0
    %1292 = vmatprep.subr.mxu0 0.0
    %1293 = vmatpush1.msra.mxu0 0.0
    %1294 = vmatprep.subr.mxu0 0.0
    %1295 = vmatpush1.msra.mxu0 0.0
    %1296 = vmatprep.subr.mxu0 0.0
    %1297 = vmatpush1.msra.mxu0 0.0
    %1298 = vmatprep.subr.mxu0 0.0
    %1299 = vmatpush1.msra.mxu0 0.0
    %1300 = vmatprep.subr.mxu0 0.0
    %1301 = vmatpush1.msra.mxu0 0.0
    %1302 = vmatprep.subr.mxu0 0.0
    %1303 = vmatpush1.msra.mxu0 0.0
    %1304 = vmatprep.subr.mxu0 0.0
    %1305 = vmatpush1.msra.mxu0 0.0
    %1306 = vmatprep.subr.mxu0 0.0
    %1307 = vmatpush1.msra.mxu0 0.0
    %1308 = vmatprep.subr.mxu0 0.0
    %1309 = vmatpush1.msra.mxu0 0.0
    %1310 = vmatprep.subr.mxu0 0.0
    %1311 = vmatpush1.msra.mxu0 0.0
    %1312 = vmatprep.subr.mxu0 0.0
    %1313 = vmatpush1.msra.mxu0 0.0
    %1314 = vmatprep.subr.mxu0 0.0
    %1315 = vmatpush1.msra.mxu0 0.0
    %1316 = vmatprep.subr.mxu0 0.0
    %1317 = vmatpush1.msra.mxu0 0.0
    %1318 = vmatprep.subr.mxu0 0.0
    %1319 = vmatpush1.msra.mxu0 0.0
    %1320 = vmatprep.subr.mxu0 0.0
    %1321 = vmatpush1.msra.mxu0 0.0
    %1322 = vmatprep.subr.mxu0 0.0
    %1323 = vmatpush1.msra.mxu0 0.0
    %1324 = vmatprep.subr.mxu0 0.0
    %1325 = vmatpush1.msra.mxu0 0.0
    %1326 = vmatprep.subr.mxu0 0.0
    %1327 = vmatpush1.msra.mxu0 0.0
    %1328 = vmatprep.subr.mxu0 0.0
    %1329 = vmatpush1.msra.mxu0 0.0
    %1330 = vmatprep.subr.mxu0 0.0
    %1331 = vmatpush1.msra.mxu0 0.0
    %1332 = vmatprep.subr.mxu0 0.0
    %1333 = vmatpush1.msra.mxu0 0.0
    %1334 = vmatprep.subr.mxu0 0.0
    %1335 = vmatpush1.msra.mxu0 0.0
    %1336 = vmatprep.subr.mxu0 0.0
    %1337 = vmatpush1.msra.mxu0 0.0
    %1338 = vmatprep.subr.mxu0 0.0
    %1339 = vmatpush1.msra.mxu0 0.0
    %1340 = vmatprep.mubr.f32.mxu0 0.0
    %1341 = vmatmul.mubr.f32.gmra.mrb[0].mxu0 %v1274
    %v1342 = vpop.f32.mrb[0].mxu0
    %v1343 = vadd.f32 0.0, %v1342
    %v1344 = vpop.f32.mrb[0].mxu0
    %1345 = vdwg.mxu0
    %v1346 = vadd.f32 %v1262, %v1343
    %v1348 = vrot.slane %v912, 5
    %v1350 = vsel %vm1015, %v501, %v1348
    %v1351 = vld [vmem:[%s4 + $0x80] sm:$0xff]
    %v1352 = vld [vmem:[%s4 + $0x88] sm:$0xff]
    %v1353 = vld [vmem:[%s4 + $0x90] sm:$0xff]
    %v1354 = vld [vmem:[%s4 + $0x98] sm:$0xff]
    %1356 = vrot.lane.b32.xlu0 %v1350, 32
    %v1357 = vpop.permute.xlu0 %1356
    %v1358 = vsel %vm78, %v1357, 0
    %1360 = vmatprep.subr.mxu0 0.0
    %1361 = vmatpush1.msra.mxu0 %v1351
    %1362 = vmatprep.subr.mxu0 0.0
    %1363 = vmatpush1.msra.mxu0 %v1352
    %1364 = vmatprep.subr.mxu0 0.0
    %1365 = vmatpush1.msra.mxu0 %v1353
    %1366 = vmatprep.subr.mxu0 0.0
    %1367 = vmatpush1.msra.mxu0 %v1354
    %1368 = vmatprep.subr.mxu0 0.0
    %1369 = vmatpush1.msra.mxu0 0.0
    %1370 = vmatprep.subr.mxu0 0.0
    %1371 = vmatpush1.msra.mxu0 0.0
    %1372 = vmatprep.subr.mxu0 0.0
    %1373 = vmatpush1.msra.mxu0 0.0
    %1374 = vmatprep.subr.mxu0 0.0
    %1375 = vmatpush1.msra.mxu0 0.0
    %1376 = vmatprep.subr.mxu0 0.0
    %1377 = vmatpush1.msra.mxu0 0.0
    %1378 = vmatprep.subr.mxu0 0.0
    %1379 = vmatpush1.msra.mxu0 0.0
    %1380 = vmatprep.subr.mxu0 0.0
    %1381 = vmatpush1.msra.mxu0 0.0
    %1382 = vmatprep.subr.mxu0 0.0
    %1383 = vmatpush1.msra.mxu0 0.0
    %1384 = vmatprep.subr.mxu0 0.0
    %1385 = vmatpush1.msra.mxu0 0.0
    %1386 = vmatprep.subr.mxu0 0.0
    %1387 = vmatpush1.msra.mxu0 0.0
    %1388 = vmatprep.subr.mxu0 0.0
    %1389 = vmatpush1.msra.mxu0 0.0
    %1390 = vmatprep.subr.mxu0 0.0
    %1391 = vmatpush1.msra.mxu0 0.0
    %1392 = vmatprep.subr.mxu0 0.0
    %1393 = vmatpush1.msra.mxu0 0.0
    %1394 = vmatprep.subr.mxu0 0.0
    %1395 = vmatpush1.msra.mxu0 0.0
    %1396 = vmatprep.subr.mxu0 0.0
    %1397 = vmatpush1.msra.mxu0 0.0
    %1398 = vmatprep.subr.mxu0 0.0
    %1399 = vmatpush1.msra.mxu0 0.0
    %1400 = vmatprep.subr.mxu0 0.0
    %1401 = vmatpush1.msra.mxu0 0.0
    %1402 = vmatprep.subr.mxu0 0.0
    %1403 = vmatpush1.msra.mxu0 0.0
    %1404 = vmatprep.subr.mxu0 0.0
    %1405 = vmatpush1.msra.mxu0 0.0
    %1406 = vmatprep.subr.mxu0 0.0
    %1407 = vmatpush1.msra.mxu0 0.0
    %1408 = vmatprep.subr.mxu0 0.0
    %1409 = vmatpush1.msra.mxu0 0.0
    %1410 = vmatprep.subr.mxu0 0.0
    %1411 = vmatpush1.msra.mxu0 0.0
    %1412 = vmatprep.subr.mxu0 0.0
    %1413 = vmatpush1.msra.mxu0 0.0
    %1414 = vmatprep.subr.mxu0 0.0
    %1415 = vmatpush1.msra.mxu0 0.0
    %1416 = vmatprep.subr.mxu0 0.0
    %1417 = vmatpush1.msra.mxu0 0.0
    %1418 = vmatprep.subr.mxu0 0.0
    %1419 = vmatpush1.msra.mxu0 0.0
    %1420 = vmatprep.subr.mxu0 0.0
    %1421 = vmatpush1.msra.mxu0 0.0
    %1422 = vmatprep.subr.mxu0 0.0
    %1423 = vmatpush1.msra.mxu0 0.0
    %1424 = vmatprep.mubr.f32.mxu0 0.0
    %1425 = vmatmul.mubr.f32.gmra.mrb[0].mxu0 %v1358
    %v1426 = vpop.f32.mrb[0].mxu0
    %v1427 = vadd.f32 0.0, %v1426
    %v1428 = vpop.f32.mrb[0].mxu0
    %1429 = vdwg.mxu0
    %v1430 = vadd.f32 %v1346, %v1427
    %v1431 = vrot.slane %v499, 7
    %v1434 = vsel %vm1015, %v1431, %v914
    %v1435 = vld [vmem:[%s4 + $0xa0] sm:$0xff]
    %v1436 = vld [vmem:[%s4 + $0xa8] sm:$0xff]
    %v1437 = vld [vmem:[%s4 + $0xb0] sm:$0xff]
    %v1438 = vld [vmem:[%s4 + $0xb8] sm:$0xff]
    %1440 = vrot.lane.b32.xlu0 %v1434, 32
    %v1441 = vpop.permute.xlu0 %1440
    %v1442 = vsel %vm78, %v1441, 0
    %1444 = vmatprep.subr.mxu0 0.0
    %1445 = vmatpush1.msra.mxu0 %v1435
    %1446 = vmatprep.subr.mxu0 0.0
    %1447 = vmatpush1.msra.mxu0 %v1436
    %1448 = vmatprep.subr.mxu0 0.0
    %1449 = vmatpush1.msra.mxu0 %v1437
    %1450 = vmatprep.subr.mxu0 0.0
    %1451 = vmatpush1.msra.mxu0 %v1438
    %1452 = vmatprep.subr.mxu0 0.0
    %1453 = vmatpush1.msra.mxu0 0.0
    %1454 = vmatprep.subr.mxu0 0.0
    %1455 = vmatpush1.msra.mxu0 0.0
    %1456 = vmatprep.subr.mxu0 0.0
    %1457 = vmatpush1.msra.mxu0 0.0
    %1458 = vmatprep.subr.mxu0 0.0
    %1459 = vmatpush1.msra.mxu0 0.0
    %1460 = vmatprep.subr.mxu0 0.0
    %1461 = vmatpush1.msra.mxu0 0.0
    %1462 = vmatprep.subr.mxu0 0.0
    %1463 = vmatpush1.msra.mxu0 0.0
    %1464 = vmatprep.subr.mxu0 0.0
    %1465 = vmatpush1.msra.mxu0 0.0
    %1466 = vmatprep.subr.mxu0 0.0
    %1467 = vmatpush1.msra.mxu0 0.0
    %1468 = vmatprep.subr.mxu0 0.0
    %1469 = vmatpush1.msra.mxu0 0.0
    %1470 = vmatprep.subr.mxu0 0.0
    %1471 = vmatpush1.msra.mxu0 0.0
    %1472 = vmatprep.subr.mxu0 0.0
    %1473 = vmatpush1.msra.mxu0 0.0
    %1474 = vmatprep.subr.mxu0 0.0
    %1475 = vmatpush1.msra.mxu0 0.0
    %1476 = vmatprep.subr.mxu0 0.0
    %1477 = vmatpush1.msra.mxu0 0.0
    %1478 = vmatprep.subr.mxu0 0.0
    %1479 = vmatpush1.msra.mxu0 0.0
    %1480 = vmatprep.subr.mxu0 0.0
    %1481 = vmatpush1.msra.mxu0 0.0
    %1482 = vmatprep.subr.mxu0 0.0
    %1483 = vmatpush1.msra.mxu0 0.0
    %1484 = vmatprep.subr.mxu0 0.0
    %1485 = vmatpush1.msra.mxu0 0.0
    %1486 = vmatprep.subr.mxu0 0.0
    %1487 = vmatpush1.msra.mxu0 0.0
    %1488 = vmatprep.subr.mxu0 0.0
    %1489 = vmatpush1.msra.mxu0 0.0
    %1490 = vmatprep.subr.mxu0 0.0
    %1491 = vmatpush1.msra.mxu0 0.0
    %1492 = vmatprep.subr.mxu0 0.0
    %1493 = vmatpush1.msra.mxu0 0.0
    %1494 = vmatprep.subr.mxu0 0.0
    %1495 = vmatpush1.msra.mxu0 0.0
    %1496 = vmatprep.subr.mxu0 0.0
    %1497 = vmatpush1.msra.mxu0 0.0
    %1498 = vmatprep.subr.mxu0 0.0
    %1499 = vmatpush1.msra.mxu0 0.0
    %1500 = vmatprep.subr.mxu0 0.0
    %1501 = vmatpush1.msra.mxu0 0.0
    %1502 = vmatprep.subr.mxu0 0.0
    %1503 = vmatpush1.msra.mxu0 0.0
    %1504 = vmatprep.subr.mxu0 0.0
    %1505 = vmatpush1.msra.mxu0 0.0
    %1506 = vmatprep.subr.mxu0 0.0
    %1507 = vmatpush1.msra.mxu0 0.0
    %1508 = vmatprep.mubr.f32.mxu0 0.0
    %1509 = vmatmul.mubr.f32.gmra.mrb[0].mxu0 %v1442
    %v1510 = vpop.f32.mrb[0].mxu0
    %v1511 = vadd.f32 0.0, %v1510
    %v1512 = vpop.f32.mrb[0].mxu0
    %1513 = vdwg.mxu0
    %v1514 = vadd.f32 %v1430, %v1511
    %v1516 = vrot.slane %v1011, 7
    %v1518 = vsel %vm1015, %v598, %v1516
    %v1519 = vld [vmem:[%s4 + $0xc0] sm:$0xff]
    %v1520 = vld [vmem:[%s4 + $0xc8] sm:$0xff]
    %v1521 = vld [vmem:[%s4 + $0xd0] sm:$0xff]
    %v1522 = vld [vmem:[%s4 + $0xd8] sm:$0xff]
    %1524 = vrot.lane.b32.xlu0 %v1518, 32
    %v1525 = vpop.permute.xlu0 %1524
    %v1526 = vsel %vm78, %v1525, 0
    %1528 = vmatprep.subr.mxu0 0.0
    %1529 = vmatpush1.msra.mxu0 %v1519
    %1530 = vmatprep.subr.mxu0 0.0
    %1531 = vmatpush1.msra.mxu0 %v1520
    %1532 = vmatprep.subr.mxu0 0.0
    %1533 = vmatpush1.msra.mxu0 %v1521
    %1534 = vmatprep.subr.mxu0 0.0
    %1535 = vmatpush1.msra.mxu0 %v1522
    %1536 = vmatprep.subr.mxu0 0.0
    %1537 = vmatpush1.msra.mxu0 0.0
    %1538 = vmatprep.subr.mxu0 0.0
    %1539 = vmatpush1.msra.mxu0 0.0
    %1540 = vmatprep.subr.mxu0 0.0
    %1541 = vmatpush1.msra.mxu0 0.0
    %1542 = vmatprep.subr.mxu0 0.0
    %1543 = vmatpush1.msra.mxu0 0.0
    %1544 = vmatprep.subr.mxu0 0.0
    %1545 = vmatpush1.msra.mxu0 0.0
    %1546 = vmatprep.subr.mxu0 0.0
    %1547 = vmatpush1.msra.mxu0 0.0
    %1548 = vmatprep.subr.mxu0 0.0
    %1549 = vmatpush1.msra.mxu0 0.0
    %1550 = vmatprep.subr.mxu0 0.0
    %1551 = vmatpush1.msra.mxu0 0.0
    %1552 = vmatprep.subr.mxu0 0.0
    %1553 = vmatpush1.msra.mxu0 0.0
    %1554 = vmatprep.subr.mxu0 0.0
    %1555 = vmatpush1.msra.mxu0 0.0
    %1556 = vmatprep.subr.mxu0 0.0
    %1557 = vmatpush1.msra.mxu0 0.0
    %1558 = vmatprep.subr.mxu0 0.0
    %1559 = vmatpush1.msra.mxu0 0.0
    %1560 = vmatprep.subr.mxu0 0.0
    %1561 = vmatpush1.msra.mxu0 0.0
    %1562 = vmatprep.subr.mxu0 0.0
    %1563 = vmatpush1.msra.mxu0 0.0
    %1564 = vmatprep.subr.mxu0 0.0
    %1565 = vmatpush1.msra.mxu0 0.0
    %1566 = vmatprep.subr.mxu0 0.0
    %1567 = vmatpush1.msra.mxu0 0.0
    %1568 = vmatprep.subr.mxu0 0.0
    %1569 = vmatpush1.msra.mxu0 0.0
    %1570 = vmatprep.subr.mxu0 0.0
    %1571 = vmatpush1.msra.mxu0 0.0
    %1572 = vmatprep.subr.mxu0 0.0
    %1573 = vmatpush1.msra.mxu0 0.0
    %1574 = vmatprep.subr.mxu0 0.0
    %1575 = vmatpush1.msra.mxu0 0.0
    %1576 = vmatprep.subr.mxu0 0.0
    %1577 = vmatpush1.msra.mxu0 0.0
    %1578 = vmatprep.subr.mxu0 0.0
    %1579 = vmatpush1.msra.mxu0 0.0
    %1580 = vmatprep.subr.mxu0 0.0
    %1581 = vmatpush1.msra.mxu0 0.0
    %1582 = vmatprep.subr.mxu0 0.0
    %1583 = vmatpush1.msra.mxu0 0.0
    %1584 = vmatprep.subr.mxu0 0.0
    %1585 = vmatpush1.msra.mxu0 0.0
    %1586 = vmatprep.subr.mxu0 0.0
    %1587 = vmatpush1.msra.mxu0 0.0
    %1588 = vmatprep.subr.mxu0 0.0
    %1589 = vmatpush1.msra.mxu0 0.0
    %1590 = vmatprep.subr.mxu0 0.0
    %1591 = vmatpush1.msra.mxu0 0.0
    %1592 = vmatprep.mubr.f32.mxu0 0.0
    %1593 = vmatmul.mubr.f32.gmra.mrb[0].mxu0 %v1526
    %v1594 = vpop.f32.mrb[0].mxu0
    %v1595 = vadd.f32 0.0, %v1594
    %v1596 = vpop.f32.mrb[0].mxu0
    %1597 = vdwg.mxu0
    %v1598 = vadd.f32 %v1514, %v1595
    %v1599 = vrot.slane %v598, 1
    %v1601 = vsel %vm1015, %v1599, %v1011
    %v1602 = vld [vmem:[%s4 + $0xe0] sm:$0xff]
    %v1603 = vld [vmem:[%s4 + $0xe8] sm:$0xff]
    %v1604 = vld [vmem:[%s4 + $0xf0] sm:$0xff]
    %v1605 = vld [vmem:[%s4 + $0xf8] sm:$0xff]
    %1607 = vrot.lane.b32.xlu0 %v1601, 32
    %v1608 = vpop.permute.xlu0 %1607
    %v1609 = vsel %vm78, %v1608, 0
    %1611 = vmatprep.subr.mxu0 0.0
    %1612 = vmatpush1.msra.mxu0 %v1602
    %1613 = vmatprep.subr.mxu0 0.0
    %1614 = vmatpush1.msra.mxu0 %v1603
    %1615 = vmatprep.subr.mxu0 0.0
    %1616 = vmatpush1.msra.mxu0 %v1604
    %1617 = vmatprep.subr.mxu0 0.0
    %1618 = vmatpush1.msra.mxu0 %v1605
    %1619 = vmatprep.subr.mxu0 0.0
    %1620 = vmatpush1.msra.mxu0 0.0
    %1621 = vmatprep.subr.mxu0 0.0
    %1622 = vmatpush1.msra.mxu0 0.0
    %1623 = vmatprep.subr.mxu0 0.0
    %1624 = vmatpush1.msra.mxu0 0.0
    %1625 = vmatprep.subr.mxu0 0.0
    %1626 = vmatpush1.msra.mxu0 0.0
    %1627 = vmatprep.subr.mxu0 0.0
    %1628 = vmatpush1.msra.mxu0 0.0
    %1629 = vmatprep.subr.mxu0 0.0
    %1630 = vmatpush1.msra.mxu0 0.0
    %1631 = vmatprep.subr.mxu0 0.0
    %1632 = vmatpush1.msra.mxu0 0.0
    %1633 = vmatprep.subr.mxu0 0.0
    %1634 = vmatpush1.msra.mxu0 0.0
    %1635 = vmatprep.subr.mxu0 0.0
    %1636 = vmatpush1.msra.mxu0 0.0
    %1637 = vmatprep.subr.mxu0 0.0
    %1638 = vmatpush1.msra.mxu0 0.0
    %1639 = vmatprep.subr.mxu0 0.0
    %1640 = vmatpush1.msra.mxu0 0.0
    %1641 = vmatprep.subr.mxu0 0.0
    %1642 = vmatpush1.msra.mxu0 0.0
    %1643 = vmatprep.subr.mxu0 0.0
    %1644 = vmatpush1.msra.mxu0 0.0
    %1645 = vmatprep.subr.mxu0 0.0
    %1646 = vmatpush1.msra.mxu0 0.0
    %1647 = vmatprep.subr.mxu0 0.0
    %1648 = vmatpush1.msra.mxu0 0.0
    %1649 = vmatprep.subr.mxu0 0.0
    %1650 = vmatpush1.msra.mxu0 0.0
    %1651 = vmatprep.subr.mxu0 0.0
    %1652 = vmatpush1.msra.mxu0 0.0
    %1653 = vmatprep.subr.mxu0 0.0
    %1654 = vmatpush1.msra.mxu0 0.0
    %1655 = vmatprep.subr.mxu0 0.0
    %1656 = vmatpush1.msra.mxu0 0.0
    %1657 = vmatprep.subr.mxu0 0.0
    %1658 = vmatpush1.msra.mxu0 0.0
    %1659 = vmatprep.subr.mxu0 0.0
    %1660 = vmatpush1.msra.mxu0 0.0
    %1661 = vmatprep.subr.mxu0 0.0
    %1662 = vmatpush1.msra.mxu0 0.0
    %1663 = vmatprep.subr.mxu0 0.0
    %1664 = vmatpush1.msra.mxu0 0.0
    %1665 = vmatprep.subr.mxu0 0.0
    %1666 = vmatpush1.msra.mxu0 0.0
    %1667 = vmatprep.subr.mxu0 0.0
    %1668 = vmatpush1.msra.mxu0 0.0
    %1669 = vmatprep.subr.mxu0 0.0
    %1670 = vmatpush1.msra.mxu0 0.0
    %1671 = vmatprep.subr.mxu0 0.0
    %1672 = vmatpush1.msra.mxu0 0.0
    %1673 = vmatprep.subr.mxu0 0.0
    %1674 = vmatpush1.msra.mxu0 0.0
    %1675 = vmatprep.mubr.f32.mxu0 0.0
    %1676 = vmatmul.mubr.f32.gmra.mrb[0].mxu0 %v1609
    %v1677 = vpop.f32.mrb[0].mxu0
    %v1678 = vadd.f32 0.0, %v1677
    %v1679 = vpop.f32.mrb[0].mxu0
    %1680 = vdwg.mxu0
    %v1681 = vadd.f32 %v1598, %v1678
    %v1682 = vld [vmem:[%s5] sm:$0x1]
    %v1684 = vlaneseq
    %v1685 = vshrl.u32 %v1684, 7
    %v1686 = vsub.s32 0, %v1685
    %v1687 = vrot.slane %v1682, %v1686
    %v1689 = vadd.f32 %v1681, %v1687
    %1690 = vst [vmem:[#allocation2] sm:$0x3] %v1689
    // Predicated region
    $region26: #{lstm_model_forward.1} parent=1 // pred_check
      _
    $region27: #{lstm_model_forward.1} parent=1 // pred_check_branch
      %1692 = sbr.rel (0) target = $region29
    $region28: #{lstm_model_forward.1} parent=1 // pred_region
      %s1694 = ssub.s32 32, 32
      %1695 = vsyncadd [#allocation3], %s1694
      %s1697 = sshll.u32 [#allocation2], 4
      %s1698 = int_to_ptr.vmem [resolvable:$true] %s1697
      %1700 = dma.vmem_to_hbm [thread:$0]  %s1698, 32, %s6, [#allocation3]
    $region29: #{lstm_model_forward.1} parent=1 // pred_fallthru
      _
    // Predicated region
    $region30: #{lstm_model_forward.1} parent=1 // pred_check
      _
    $region31: #{lstm_model_forward.1} parent=1 // pred_check_branch
      %1702 = sbr.rel (0) target = $region33
    $region32: #{lstm_model_forward.1} parent=1 // pred_region
      %1703 = dma.done [#allocation3], 32
    $region33: #{lstm_model_forward.1} parent=1 // pred_fallthru
      _
    %1704 = vsyncpa [#allocation3], 1

</llo_original>
